<compile_context>
chip_gen: v7x
topology: tpu7x:2x2x1
jax: 0.10.0
libtpu: 0.0.40
codegen_flags: <defaults>
</compile_context>

<pallas_src>
import functools
import math

import jax
import jax.numpy as jnp
from jax import lax
from jax.experimental import pallas as pl
from jax.experimental.pallas import tpu as pltpu


# ---------------------------------------------------------------------------
# Pallas kernel: whole encoder forward for one lane-tile of whole batch elems.
#   x_ref : (Cpad, cols)          bf16  activations (cols = nb * L)
#   w_ref : (8, 3*Cpad, Cpad)     bf16  tap-stacked conv weights (BN folded)
#   b_ref : (8, Cpad, 1)          f32   biases (BN folded)
#   o_ref : (Cpad, cols)          f32   (rows >= out_channels are zeros)
# ---------------------------------------------------------------------------
def encoder_kernel(x_ref, w_ref, b_ref, o_ref, *, L):
    Cpad = w_ref.shape[2]
    cols = x_ref.shape[1]

    # Hoisted once: column position within each length-L sequence + edge masks.
    pos = lax.broadcasted_iota(jnp.int32, (Cpad, cols), 1) % L
    is_first = pos == 0
    is_last = pos == (L - 1)

    def conv3(h, layer):
        # y[:, l] = W0 @ h[:, l-1] + W1 @ h[:, l] + W2 @ h[:, l+1]
        # Output-tap stacking: one K=Cpad MXU matmul producing all three taps,
        # then shift/mask the tap slices on the output side (no concatenate).
        hb = h if h.dtype == jnp.bfloat16 else h.astype(jnp.bfloat16)
        A = jnp.dot(w_ref[layer], hb, preferred_element_type=jnp.float32)
        a0 = jnp.where(is_first, 0.0, pltpu.roll(A[:Cpad], shift=1, axis=1))
        a1 = A[Cpad:2 * Cpad]
        a2 = jnp.where(is_last, 0.0,
                       pltpu.roll(A[2 * Cpad:], shift=cols - 1, axis=1))
        return a0 + a1 + a2 + b_ref[layer]  # (Cpad, 1) bias broadcasts

    relu = lambda v: jnp.maximum(v, 0.0)

    # modelConv1: Conv1d + (BN folded) + ReLU
    h = relu(conv3(x_ref[...], 0))

    # 3 x modelResBlock: relu( conv2(relu(conv1(h))) + h )
    for i in range(3):
        t = relu(conv3(h, 1 + 2 * i))
        t = conv3(t, 2 + 2 * i) + h
        h = relu(t)

    # final Conv1d(filters[3] -> out_channels) + ReLU
    o_ref[...] = relu(conv3(h, 7)).astype(o_ref.dtype)


# ---------------------------------------------------------------------------
# Wrapper
# ---------------------------------------------------------------------------
def _choose_batch_tile(N, L, max_lanes=32768):
    """Batch elements per grid step; tiles always contain whole sequences.

    Prefers an even number of grid steps (>= 2) for v7x's two TensorCores and
    the largest tile that fits under the lane cap."""
    if N < 2 or L % 128 != 0:
        # TODO(synk): for N == 1 split L into halves (with a 1-col halo) so the
        # v7x megacore "parallel" axis has >= 2 steps.
        return N
    cands = [nb for nb in range(1, N)
             if N % nb == 0 and (N // nb) >= 2 and nb * L <= max_lanes]
    if not cands:
        return N
    even = [nb for nb in cands if (N // nb) % 2 == 0]
    pool = even if even else cands
    return max(pool)


def clfcrn_encoder_pallas(x, params):
    """x: (N, Cin, L) f32.  params: list of 8 (w (Cout,Cin,3), b (Cout,)) pairs
    (BN already folded).  Returns (N, Cout_final, L) f32."""
    N, Cin, L = x.shape
    out_channels = params[-1][0].shape[0]

    # Common padded channel count (sublane-friendly).
    Cpad = max(16, Cin, out_channels)
    Cpad = ((Cpad + 7) // 8) * 8

    # Flatten batch into the lane axis: (Cin, N*L), zero-pad channels, bf16.
    x_flat = jnp.transpose(x, (1, 0, 2)).reshape(Cin, N * L)
    if Cin < Cpad:
        x_flat = jnp.pad(x_flat, ((0, Cpad - Cin), (0, 0)))
    x_flat = x_flat.astype(jnp.bfloat16)

    # Pack all 8 layers into two resident arrays (output-tap stacking:
    # rows [0:C) = tap l-1, [C:2C) = tap l, [2C:3C) = tap l+1).
    w_list, b_list = [], []
    for w, b in params:
        co, ci, _ = w.shape
        w_pad = jnp.zeros((Cpad, Cpad, 3), jnp.float32).at[:co, :ci, :].set(w)
        b_pad = jnp.zeros((Cpad,), jnp.float32).at[:co].set(b)
        # (Cout, Cin, 3) -> (3, Cout, Cin) -> (3*Cout, Cin)
        w_list.append(jnp.transpose(w_pad, (2, 0, 1)).reshape(3 * Cpad, Cpad))
        b_list.append(b_pad.reshape(Cpad, 1))
    w_all = jnp.stack(w_list).astype(jnp.bfloat16)  # (8, 3*Cpad, Cpad)
    b_all = jnp.stack(b_list)                       # (8, Cpad, 1) f32

    nb = _choose_batch_tile(N, L)
    num_tiles = N // nb
    cols = nb * L

    kernel = functools.partial(encoder_kernel, L=L)

    # Advisory cost estimate (8 conv layers, each a (3C x C x cols) matmul).
    cost = pl.CostEstimate(
        flops=int(8 * 2 * 3 * Cpad * Cpad * N * L),
        transcendentals=0,
        bytes_accessed=int(Cpad * N * L * 2 + Cpad * N * L * 4
                           + w_all.size * 2 + b_all.size * 4),
    )

    # VMEM budget: double-buffered x/out blocks + resident weights + live temps.
    tile_bytes = (2 * Cpad * cols * 2          # x blocks (bf16, double-buffered)
                  + 2 * Cpad * cols * 4        # out blocks (f32, double-buffered)
                  + 2 * (w_all.size * 2 + b_all.size * 4)
                  + 3 * Cpad * cols * 4        # A (3*Cpad, cols) f32
                  + 8 * Cpad * cols * 4)       # misc live f32 temporaries
    vmem_limit = int(min(64 * 1024 * 1024, max(16 * 1024 * 1024, 2 * tile_bytes)))

    out_flat = pl.pallas_call(
        kernel,
        out_shape=jax.ShapeDtypeStruct((Cpad, N * L), jnp.float32),
        grid=(num_tiles,),
        in_specs=[
            pl.BlockSpec((Cpad, cols), lambda t: (0, t)),
            pl.BlockSpec(w_all.shape, lambda t: (0, 0, 0)),
            pl.BlockSpec(b_all.shape, lambda t: (0, 0, 0)),
        ],
        out_specs=pl.BlockSpec((Cpad, cols), lambda t: (0, t)),
        compiler_params=pltpu.CompilerParams(
            dimension_semantics=("parallel",),
            vmem_limit_bytes=vmem_limit),
        cost_estimate=cost,
    )(x_flat, w_all, b_all)

    out = out_flat.reshape(Cpad, N, L)
    return jnp.transpose(out[:out_channels], (1, 0, 2))


# ---------------------------------------------------------------------------
# Parameter construction (deterministic, PyTorch-default-style init) + BN fold
# ---------------------------------------------------------------------------
def init_conv(key, cout, cin, k=3):
    fan_in = cin * k
    bound = 1.0 / math.sqrt(fan_in)
    kw, kb = jax.random.split(key)
    w = jax.random.uniform(kw, (cout, cin, k), jnp.float32, -bound, bound)
    b = jax.random.uniform(kb, (cout,), jnp.float32, -bound, bound)
    return w, b


def init_bn(key, c):
    kg, kb, km, kv = jax.random.split(key, 4)
    gamma = 1.0 + 0.1 * jax.random.normal(kg, (c,), jnp.float32)
    beta = 0.1 * jax.random.normal(kb, (c,), jnp.float32)
    mean = 0.1 * jax.random.normal(km, (c,), jnp.float32)
    var = jnp.abs(1.0 + 0.1 * jax.random.normal(kv, (c,), jnp.float32))
    return gamma, beta, mean, var


def fold_bn(w, b, gamma, beta, mean, var, eps=1e-5):
    s = gamma / jnp.sqrt(var + eps)
    return w * s[:, None, None], (b - mean) * s + beta


def build_params(key, in_channels, out_channels, is_batchnorm):
    filters = [16, 16, 16, 16]
    layer_dims = [(in_channels, filters[0], is_batchnorm)]
    for i in range(3):
        layer_dims.append((filters[i], filters[i + 1], is_batchnorm))      # resblock conv1
        layer_dims.append((filters[i + 1], filters[i + 1], is_batchnorm))  # resblock conv2
    layer_dims.append((filters[3], out_channels, False))                   # final Conv1d

    keys = jax.random.split(key, 2 * len(layer_dims))
    params = []
    for i, (cin, cout, has_bn) in enumerate(layer_dims):
        w, b = init_conv(keys[2 * i], cout, cin)
        if has_bn:
            gamma, beta, mean, var = init_bn(keys[2 * i + 1], cout)
            w, b = fold_bn(w, b, gamma, beta, mean, var)
        params.append((w, b))
    return params


# ---------------------------------------------------------------------------
# Pure-JAX f32 reference (same folded params) for a correctness check
# ---------------------------------------------------------------------------
def conv1d_ref(x, w, b):
    y = lax.conv_general_dilated(x, w, window_strides=(1,), padding=[(1, 1)],
                                 dimension_numbers=("NCH", "OIH", "NCH"))
    return y + b[None, :, None]


def forward_ref(x, params):
    relu = lambda v: jnp.maximum(v, 0.0)
    h = relu(conv1d_ref(x, *params[0]))
    for i in range(3):
        t = relu(conv1d_ref(h, *params[1 + 2 * i]))
        t = conv1d_ref(t, *params[2 + 2 * i]) + h
        h = relu(t)
    return relu(conv1d_ref(h, *params[7]))


if __name__ == "__main__":
    key = jax.random.PRNGKey(0)
    k_x, k_p = jax.random.split(key)

    N, in_channels, L = 2, 4, 128
    out_channels = 16
    is_batchnorm = True

    x = jax.random.normal(k_x, (N, in_channels, L), jnp.float32)
    params = build_params(k_p, in_channels, out_channels, is_batchnorm)

    out = jax.block_until_ready(clfcrn_encoder_pallas(x, params))
    ref = jax.block_until_ready(forward_ref(x, params))

    assert out.shape == (N, out_channels, L)
    err = float(jnp.max(jnp.abs(out - ref)))
    # bf16 MXU inputs (f32 accumulation) -> slightly looser tolerance vs f32 ref.
    assert err < 2e-2, err
    print("KERNEL_OK")
</pallas_src>

<mosaic_0001>
module attributes {stable_mosaic.version = 11 : i64} {
  func.func @encoder_kernel(%arg0: i32, %arg1: memref<16x128xbf16, #tpu.memory_space<vmem>>, %arg2: memref<8x48x16xbf16, #tpu.memory_space<vmem>>, %arg3: memref<8x16x1xf32, #tpu.memory_space<vmem>>, %arg4: memref<16x128xf32, #tpu.memory_space<vmem>>) attributes {dimension_semantics = [#tpu.dimension_semantics<parallel>], iteration_bounds = array<i64: 2>, scalar_prefetch = 0 : i64, scratch_operands = 0 : i64, tpu.core_type = #tpu.core_type<tc>, window_params = [{transform_indices = @transform_0, window_bounds = array<i64: 16, 128>}, {pipeline_mode = #tpu.pipeline_mode<synchronous>, transform_indices = @transform_1, window_bounds = array<i64: 8, 48, 16>}, {pipeline_mode = #tpu.pipeline_mode<synchronous>, transform_indices = @transform_2, window_bounds = array<i64: 8, 16, 1>}, {transform_indices = @transform_3, window_bounds = array<i64: 16, 128>}]} {
    %0 = tpu.iota {dimensions = array<i32: 1>} : vector<16x128xi32>
    %c128_i32 = arith.constant 128 : i32
    %c0_i32 = arith.constant 0 : i32
    %1 = arith.cmpi eq, %c128_i32, %c0_i32 : i32
    %c1_i32 = arith.constant 1 : i32
    %2 = arith.select %1, %c1_i32, %c128_i32 : i32
    %3 = vector.broadcast %2 : i32 to vector<16x128xi32>
    %4 = arith.remsi %0, %3 : vector<16x128xi32>
    %c0_i32_0 = arith.constant 0 : i32
    %5 = vector.broadcast %c0_i32_0 : i32 to vector<16x128xi32>
    %6 = arith.cmpi ne, %4, %5 : vector<16x128xi32>
    %c0_i32_1 = arith.constant 0 : i32
    %7 = vector.broadcast %c0_i32_1 : i32 to vector<16x128xi32>
    %8 = arith.cmpi slt, %4, %7 : vector<16x128xi32>
    %c0_i32_2 = arith.constant 0 : i32
    %9 = arith.cmpi slt, %2, %c0_i32_2 : i32
    %10 = vector.broadcast %9 : i1 to vector<16x128xi1>
    %11 = vector.broadcast %10 : vector<16x128xi1> to vector<16x128xi1>
    %12 = arith.xori %8, %11 : vector<16x128xi1>
    %13 = arith.andi %12, %6 : vector<16x128xi1>
    %14 = vector.broadcast %2 : i32 to vector<16x128xi32>
    %15 = arith.addi %4, %14 : vector<16x128xi32>
    %16 = arith.select %13, %15, %4 : vector<16x128xi1>, vector<16x128xi32>
    %c0_i32_3 = arith.constant 0 : i32
    %17 = vector.broadcast %c0_i32_3 : i32 to vector<16x128xi32>
    %18 = arith.cmpi eq, %16, %17 : vector<16x128xi32>
    %c127_i32 = arith.constant 127 : i32
    %19 = vector.broadcast %c127_i32 : i32 to vector<16x128xi32>
    %20 = arith.cmpi eq, %16, %19 : vector<16x128xi32>
    %c0 = arith.constant 0 : index
    %c0_4 = arith.constant 0 : index
    %21 = vector.load %arg1[%c0, %c0_4] : memref<16x128xbf16, #tpu.memory_space<vmem>>, vector<16x128xbf16>
    %c0_5 = arith.constant 0 : index
    %c0_6 = arith.constant 0 : index
    %c0_7 = arith.constant 0 : index
    %22 = vector.load %arg2[%c0_5, %c0_6, %c0_7] : memref<8x48x16xbf16, #tpu.memory_space<vmem>>, vector<1x48x16xbf16>
    %23 = vector.shape_cast %22 : vector<1x48x16xbf16> to vector<48x16xbf16>
    %cst = arith.constant dense<0.000000e+00> : vector<48x128xf32>
    %24 = tpu.matmul %23, %21, %cst {dimension_numbers = #tpu.dot_dimension_numbers<[1], [0], [0], [1], [0, 0, 1, 1], [], []>} : vector<48x16xbf16>, vector<16x128xbf16>, vector<48x128xf32> -> vector<48x128xf32>
    %25 = vector.extract_strided_slice %24 {offsets = [0, 0], sizes = [16, 128], strides = [1, 1]} : vector<48x128xf32> to vector<16x128xf32>
    %c1_i32_8 = arith.constant 1 : i32
    %26 = tpu.dynamic_rotate %25 by %c1_i32_8 dim 1 : vector<16x128xf32>, i32 -> vector<16x128xf32>
    %cst_9 = arith.constant 0.000000e+00 : f32
    %27 = vector.broadcast %cst_9 : f32 to vector<16x128xf32>
    %28 = arith.select %18, %27, %26 : vector<16x128xi1>, vector<16x128xf32>
    %29 = vector.extract_strided_slice %24 {offsets = [16, 0], sizes = [16, 128], strides = [1, 1]} : vector<48x128xf32> to vector<16x128xf32>
    %30 = vector.extract_strided_slice %24 {offsets = [32, 0], sizes = [16, 128], strides = [1, 1]} : vector<48x128xf32> to vector<16x128xf32>
    %c127_i32_10 = arith.constant 127 : i32
    %31 = tpu.dynamic_rotate %30 by %c127_i32_10 dim 1 : vector<16x128xf32>, i32 -> vector<16x128xf32>
    %cst_11 = arith.constant 0.000000e+00 : f32
    %32 = vector.broadcast %cst_11 : f32 to vector<16x128xf32>
    %33 = arith.select %20, %32, %31 : vector<16x128xi1>, vector<16x128xf32>
    %34 = arith.addf %28, %29 : vector<16x128xf32>
    %35 = arith.addf %34, %33 : vector<16x128xf32>
    %c0_12 = arith.constant 0 : index
    %c0_13 = arith.constant 0 : index
    %c0_14 = arith.constant 0 : index
    %36 = vector.load %arg3[%c0_12, %c0_13, %c0_14] : memref<8x16x1xf32, #tpu.memory_space<vmem>>, vector<1x16x1xf32>
    %37 = vector.shape_cast %36 : vector<1x16x1xf32> to vector<16x1xf32>
    %38 = vector.broadcast %37 : vector<16x1xf32> to vector<16x128xf32>
    %39 = arith.addf %35, %38 : vector<16x128xf32>
    %cst_15 = arith.constant 0.000000e+00 : f32
    %40 = vector.broadcast %cst_15 : f32 to vector<16x128xf32>
    %41 = arith.maximumf %39, %40 : vector<16x128xf32>
    %42 = arith.truncf %41 : vector<16x128xf32> to vector<16x128xbf16>
    %c1 = arith.constant 1 : index
    %c0_16 = arith.constant 0 : index
    %c0_17 = arith.constant 0 : index
    %43 = vector.load %arg2[%c1, %c0_16, %c0_17] : memref<8x48x16xbf16, #tpu.memory_space<vmem>>, vector<1x48x16xbf16>
    %44 = vector.shape_cast %43 : vector<1x48x16xbf16> to vector<48x16xbf16>
    %cst_18 = arith.constant dense<0.000000e+00> : vector<48x128xf32>
    %45 = tpu.matmul %44, %42, %cst_18 {dimension_numbers = #tpu.dot_dimension_numbers<[1], [0], [0], [1], [0, 0, 1, 1], [], []>} : vector<48x16xbf16>, vector<16x128xbf16>, vector<48x128xf32> -> vector<48x128xf32>
    %46 = vector.extract_strided_slice %45 {offsets = [0, 0], sizes = [16, 128], strides = [1, 1]} : vector<48x128xf32> to vector<16x128xf32>
    %c1_i32_19 = arith.constant 1 : i32
    %47 = tpu.dynamic_rotate %46 by %c1_i32_19 dim 1 : vector<16x128xf32>, i32 -> vector<16x128xf32>
    %cst_20 = arith.constant 0.000000e+00 : f32
    %48 = vector.broadcast %cst_20 : f32 to vector<16x128xf32>
    %49 = arith.select %18, %48, %47 : vector<16x128xi1>, vector<16x128xf32>
    %50 = vector.extract_strided_slice %45 {offsets = [16, 0], sizes = [16, 128], strides = [1, 1]} : vector<48x128xf32> to vector<16x128xf32>
    %51 = vector.extract_strided_slice %45 {offsets = [32, 0], sizes = [16, 128], strides = [1, 1]} : vector<48x128xf32> to vector<16x128xf32>
    %c127_i32_21 = arith.constant 127 : i32
    %52 = tpu.dynamic_rotate %51 by %c127_i32_21 dim 1 : vector<16x128xf32>, i32 -> vector<16x128xf32>
    %cst_22 = arith.constant 0.000000e+00 : f32
    %53 = vector.broadcast %cst_22 : f32 to vector<16x128xf32>
    %54 = arith.select %20, %53, %52 : vector<16x128xi1>, vector<16x128xf32>
    %55 = arith.addf %49, %50 : vector<16x128xf32>
    %56 = arith.addf %55, %54 : vector<16x128xf32>
    %c1_23 = arith.constant 1 : index
    %c0_24 = arith.constant 0 : index
    %c0_25 = arith.constant 0 : index
    %57 = vector.load %arg3[%c1_23, %c0_24, %c0_25] : memref<8x16x1xf32, #tpu.memory_space<vmem>>, vector<1x16x1xf32>
    %58 = vector.shape_cast %57 : vector<1x16x1xf32> to vector<16x1xf32>
    %59 = vector.broadcast %58 : vector<16x1xf32> to vector<16x128xf32>
    %60 = arith.addf %56, %59 : vector<16x128xf32>
    %cst_26 = arith.constant 0.000000e+00 : f32
    %61 = vector.broadcast %cst_26 : f32 to vector<16x128xf32>
    %62 = arith.maximumf %60, %61 : vector<16x128xf32>
    %63 = arith.truncf %62 : vector<16x128xf32> to vector<16x128xbf16>
    %c2 = arith.constant 2 : index
    %c0_27 = arith.constant 0 : index
    %c0_28 = arith.constant 0 : index
    %64 = vector.load %arg2[%c2, %c0_27, %c0_28] : memref<8x48x16xbf16, #tpu.memory_space<vmem>>, vector<1x48x16xbf16>
    %65 = vector.shape_cast %64 : vector<1x48x16xbf16> to vector<48x16xbf16>
    %cst_29 = arith.constant dense<0.000000e+00> : vector<48x128xf32>
    %66 = tpu.matmul %65, %63, %cst_29 {dimension_numbers = #tpu.dot_dimension_numbers<[1], [0], [0], [1], [0, 0, 1, 1], [], []>} : vector<48x16xbf16>, vector<16x128xbf16>, vector<48x128xf32> -> vector<48x128xf32>
    %67 = vector.extract_strided_slice %66 {offsets = [0, 0], sizes = [16, 128], strides = [1, 1]} : vector<48x128xf32> to vector<16x128xf32>
    %c1_i32_30 = arith.constant 1 : i32
    %68 = tpu.dynamic_rotate %67 by %c1_i32_30 dim 1 : vector<16x128xf32>, i32 -> vector<16x128xf32>
    %cst_31 = arith.constant 0.000000e+00 : f32
    %69 = vector.broadcast %cst_31 : f32 to vector<16x128xf32>
    %70 = arith.select %18, %69, %68 : vector<16x128xi1>, vector<16x128xf32>
    %71 = vector.extract_strided_slice %66 {offsets = [16, 0], sizes = [16, 128], strides = [1, 1]} : vector<48x128xf32> to vector<16x128xf32>
    %72 = vector.extract_strided_slice %66 {offsets = [32, 0], sizes = [16, 128], strides = [1, 1]} : vector<48x128xf32> to vector<16x128xf32>
    %c127_i32_32 = arith.constant 127 : i32
    %73 = tpu.dynamic_rotate %72 by %c127_i32_32 dim 1 : vector<16x128xf32>, i32 -> vector<16x128xf32>
    %cst_33 = arith.constant 0.000000e+00 : f32
    %74 = vector.broadcast %cst_33 : f32 to vector<16x128xf32>
    %75 = arith.select %20, %74, %73 : vector<16x128xi1>, vector<16x128xf32>
    %76 = arith.addf %70, %71 : vector<16x128xf32>
    %77 = arith.addf %76, %75 : vector<16x128xf32>
    %c2_34 = arith.constant 2 : index
    %c0_35 = arith.constant 0 : index
    %c0_36 = arith.constant 0 : index
    %78 = vector.load %arg3[%c2_34, %c0_35, %c0_36] : memref<8x16x1xf32, #tpu.memory_space<vmem>>, vector<1x16x1xf32>
    %79 = vector.shape_cast %78 : vector<1x16x1xf32> to vector<16x1xf32>
    %80 = vector.broadcast %79 : vector<16x1xf32> to vector<16x128xf32>
    %81 = arith.addf %77, %80 : vector<16x128xf32>
    %82 = arith.addf %81, %41 : vector<16x128xf32>
    %cst_37 = arith.constant 0.000000e+00 : f32
    %83 = vector.broadcast %cst_37 : f32 to vector<16x128xf32>
    %84 = arith.maximumf %82, %83 : vector<16x128xf32>
    %85 = arith.truncf %84 : vector<16x128xf32> to vector<16x128xbf16>
    %c3 = arith.constant 3 : index
    %c0_38 = arith.constant 0 : index
    %c0_39 = arith.constant 0 : index
    %86 = vector.load %arg2[%c3, %c0_38, %c0_39] : memref<8x48x16xbf16, #tpu.memory_space<vmem>>, vector<1x48x16xbf16>
    %87 = vector.shape_cast %86 : vector<1x48x16xbf16> to vector<48x16xbf16>
    %cst_40 = arith.constant dense<0.000000e+00> : vector<48x128xf32>
    %88 = tpu.matmul %87, %85, %cst_40 {dimension_numbers = #tpu.dot_dimension_numbers<[1], [0], [0], [1], [0, 0, 1, 1], [], []>} : vector<48x16xbf16>, vector<16x128xbf16>, vector<48x128xf32> -> vector<48x128xf32>
    %89 = vector.extract_strided_slice %88 {offsets = [0, 0], sizes = [16, 128], strides = [1, 1]} : vector<48x128xf32> to vector<16x128xf32>
    %c1_i32_41 = arith.constant 1 : i32
    %90 = tpu.dynamic_rotate %89 by %c1_i32_41 dim 1 : vector<16x128xf32>, i32 -> vector<16x128xf32>
    %cst_42 = arith.constant 0.000000e+00 : f32
    %91 = vector.broadcast %cst_42 : f32 to vector<16x128xf32>
    %92 = arith.select %18, %91, %90 : vector<16x128xi1>, vector<16x128xf32>
    %93 = vector.extract_strided_slice %88 {offsets = [16, 0], sizes = [16, 128], strides = [1, 1]} : vector<48x128xf32> to vector<16x128xf32>
    %94 = vector.extract_strided_slice %88 {offsets = [32, 0], sizes = [16, 128], strides = [1, 1]} : vector<48x128xf32> to vector<16x128xf32>
    %c127_i32_43 = arith.constant 127 : i32
    %95 = tpu.dynamic_rotate %94 by %c127_i32_43 dim 1 : vector<16x128xf32>, i32 -> vector<16x128xf32>
    %cst_44 = arith.constant 0.000000e+00 : f32
    %96 = vector.broadcast %cst_44 : f32 to vector<16x128xf32>
    %97 = arith.select %20, %96, %95 : vector<16x128xi1>, vector<16x128xf32>
    %98 = arith.addf %92, %93 : vector<16x128xf32>
    %99 = arith.addf %98, %97 : vector<16x128xf32>
    %c3_45 = arith.constant 3 : index
    %c0_46 = arith.constant 0 : index
    %c0_47 = arith.constant 0 : index
    %100 = vector.load %arg3[%c3_45, %c0_46, %c0_47] : memref<8x16x1xf32, #tpu.memory_space<vmem>>, vector<1x16x1xf32>
    %101 = vector.shape_cast %100 : vector<1x16x1xf32> to vector<16x1xf32>
    %102 = vector.broadcast %101 : vector<16x1xf32> to vector<16x128xf32>
    %103 = arith.addf %99, %102 : vector<16x128xf32>
    %cst_48 = arith.constant 0.000000e+00 : f32
    %104 = vector.broadcast %cst_48 : f32 to vector<16x128xf32>
    %105 = arith.maximumf %103, %104 : vector<16x128xf32>
    %106 = arith.truncf %105 : vector<16x128xf32> to vector<16x128xbf16>
    %c4 = arith.constant 4 : index
    %c0_49 = arith.constant 0 : index
    %c0_50 = arith.constant 0 : index
    %107 = vector.load %arg2[%c4, %c0_49, %c0_50] : memref<8x48x16xbf16, #tpu.memory_space<vmem>>, vector<1x48x16xbf16>
    %108 = vector.shape_cast %107 : vector<1x48x16xbf16> to vector<48x16xbf16>
    %cst_51 = arith.constant dense<0.000000e+00> : vector<48x128xf32>
    %109 = tpu.matmul %108, %106, %cst_51 {dimension_numbers = #tpu.dot_dimension_numbers<[1], [0], [0], [1], [0, 0, 1, 1], [], []>} : vector<48x16xbf16>, vector<16x128xbf16>, vector<48x128xf32> -> vector<48x128xf32>
    %110 = vector.extract_strided_slice %109 {offsets = [0, 0], sizes = [16, 128], strides = [1, 1]} : vector<48x128xf32> to vector<16x128xf32>
    %c1_i32_52 = arith.constant 1 : i32
    %111 = tpu.dynamic_rotate %110 by %c1_i32_52 dim 1 : vector<16x128xf32>, i32 -> vector<16x128xf32>
    %cst_53 = arith.constant 0.000000e+00 : f32
    %112 = vector.broadcast %cst_53 : f32 to vector<16x128xf32>
    %113 = arith.select %18, %112, %111 : vector<16x128xi1>, vector<16x128xf32>
    %114 = vector.extract_strided_slice %109 {offsets = [16, 0], sizes = [16, 128], strides = [1, 1]} : vector<48x128xf32> to vector<16x128xf32>
    %115 = vector.extract_strided_slice %109 {offsets = [32, 0], sizes = [16, 128], strides = [1, 1]} : vector<48x128xf32> to vector<16x128xf32>
    %c127_i32_54 = arith.constant 127 : i32
    %116 = tpu.dynamic_rotate %115 by %c127_i32_54 dim 1 : vector<16x128xf32>, i32 -> vector<16x128xf32>
    %cst_55 = arith.constant 0.000000e+00 : f32
    %117 = vector.broadcast %cst_55 : f32 to vector<16x128xf32>
    %118 = arith.select %20, %117, %116 : vector<16x128xi1>, vector<16x128xf32>
    %119 = arith.addf %113, %114 : vector<16x128xf32>
    %120 = arith.addf %119, %118 : vector<16x128xf32>
    %c4_56 = arith.constant 4 : index
    %c0_57 = arith.constant 0 : index
    %c0_58 = arith.constant 0 : index
    %121 = vector.load %arg3[%c4_56, %c0_57, %c0_58] : memref<8x16x1xf32, #tpu.memory_space<vmem>>, vector<1x16x1xf32>
    %122 = vector.shape_cast %121 : vector<1x16x1xf32> to vector<16x1xf32>
    %123 = vector.broadcast %122 : vector<16x1xf32> to vector<16x128xf32>
    %124 = arith.addf %120, %123 : vector<16x128xf32>
    %125 = arith.addf %124, %84 : vector<16x128xf32>
    %cst_59 = arith.constant 0.000000e+00 : f32
    %126 = vector.broadcast %cst_59 : f32 to vector<16x128xf32>
    %127 = arith.maximumf %125, %126 : vector<16x128xf32>
    %128 = arith.truncf %127 : vector<16x128xf32> to vector<16x128xbf16>
    %c5 = arith.constant 5 : index
    %c0_60 = arith.constant 0 : index
    %c0_61 = arith.constant 0 : index
    %129 = vector.load %arg2[%c5, %c0_60, %c0_61] : memref<8x48x16xbf16, #tpu.memory_space<vmem>>, vector<1x48x16xbf16>
    %130 = vector.shape_cast %129 : vector<1x48x16xbf16> to vector<48x16xbf16>
    %cst_62 = arith.constant dense<0.000000e+00> : vector<48x128xf32>
    %131 = tpu.matmul %130, %128, %cst_62 {dimension_numbers = #tpu.dot_dimension_numbers<[1], [0], [0], [1], [0, 0, 1, 1], [], []>} : vector<48x16xbf16>, vector<16x128xbf16>, vector<48x128xf32> -> vector<48x128xf32>
    %132 = vector.extract_strided_slice %131 {offsets = [0, 0], sizes = [16, 128], strides = [1, 1]} : vector<48x128xf32> to vector<16x128xf32>
    %c1_i32_63 = arith.constant 1 : i32
    %133 = tpu.dynamic_rotate %132 by %c1_i32_63 dim 1 : vector<16x128xf32>, i32 -> vector<16x128xf32>
    %cst_64 = arith.constant 0.000000e+00 : f32
    %134 = vector.broadcast %cst_64 : f32 to vector<16x128xf32>
    %135 = arith.select %18, %134, %133 : vector<16x128xi1>, vector<16x128xf32>
    %136 = vector.extract_strided_slice %131 {offsets = [16, 0], sizes = [16, 128], strides = [1, 1]} : vector<48x128xf32> to vector<16x128xf32>
    %137 = vector.extract_strided_slice %131 {offsets = [32, 0], sizes = [16, 128], strides = [1, 1]} : vector<48x128xf32> to vector<16x128xf32>
    %c127_i32_65 = arith.constant 127 : i32
    %138 = tpu.dynamic_rotate %137 by %c127_i32_65 dim 1 : vector<16x128xf32>, i32 -> vector<16x128xf32>
    %cst_66 = arith.constant 0.000000e+00 : f32
    %139 = vector.broadcast %cst_66 : f32 to vector<16x128xf32>
    %140 = arith.select %20, %139, %138 : vector<16x128xi1>, vector<16x128xf32>
    %141 = arith.addf %135, %136 : vector<16x128xf32>
    %142 = arith.addf %141, %140 : vector<16x128xf32>
    %c5_67 = arith.constant 5 : index
    %c0_68 = arith.constant 0 : index
    %c0_69 = arith.constant 0 : index
    %143 = vector.load %arg3[%c5_67, %c0_68, %c0_69] : memref<8x16x1xf32, #tpu.memory_space<vmem>>, vector<1x16x1xf32>
    %144 = vector.shape_cast %143 : vector<1x16x1xf32> to vector<16x1xf32>
    %145 = vector.broadcast %144 : vector<16x1xf32> to vector<16x128xf32>
    %146 = arith.addf %142, %145 : vector<16x128xf32>
    %cst_70 = arith.constant 0.000000e+00 : f32
    %147 = vector.broadcast %cst_70 : f32 to vector<16x128xf32>
    %148 = arith.maximumf %146, %147 : vector<16x128xf32>
    %149 = arith.truncf %148 : vector<16x128xf32> to vector<16x128xbf16>
    %c6 = arith.constant 6 : index
    %c0_71 = arith.constant 0 : index
    %c0_72 = arith.constant 0 : index
    %150 = vector.load %arg2[%c6, %c0_71, %c0_72] : memref<8x48x16xbf16, #tpu.memory_space<vmem>>, vector<1x48x16xbf16>
    %151 = vector.shape_cast %150 : vector<1x48x16xbf16> to vector<48x16xbf16>
    %cst_73 = arith.constant dense<0.000000e+00> : vector<48x128xf32>
    %152 = tpu.matmul %151, %149, %cst_73 {dimension_numbers = #tpu.dot_dimension_numbers<[1], [0], [0], [1], [0, 0, 1, 1], [], []>} : vector<48x16xbf16>, vector<16x128xbf16>, vector<48x128xf32> -> vector<48x128xf32>
    %153 = vector.extract_strided_slice %152 {offsets = [0, 0], sizes = [16, 128], strides = [1, 1]} : vector<48x128xf32> to vector<16x128xf32>
    %c1_i32_74 = arith.constant 1 : i32
    %154 = tpu.dynamic_rotate %153 by %c1_i32_74 dim 1 : vector<16x128xf32>, i32 -> vector<16x128xf32>
    %cst_75 = arith.constant 0.000000e+00 : f32
    %155 = vector.broadcast %cst_75 : f32 to vector<16x128xf32>
    %156 = arith.select %18, %155, %154 : vector<16x128xi1>, vector<16x128xf32>
    %157 = vector.extract_strided_slice %152 {offsets = [16, 0], sizes = [16, 128], strides = [1, 1]} : vector<48x128xf32> to vector<16x128xf32>
    %158 = vector.extract_strided_slice %152 {offsets = [32, 0], sizes = [16, 128], strides = [1, 1]} : vector<48x128xf32> to vector<16x128xf32>
    %c127_i32_76 = arith.constant 127 : i32
    %159 = tpu.dynamic_rotate %158 by %c127_i32_76 dim 1 : vector<16x128xf32>, i32 -> vector<16x128xf32>
    %cst_77 = arith.constant 0.000000e+00 : f32
    %160 = vector.broadcast %cst_77 : f32 to vector<16x128xf32>
    %161 = arith.select %20, %160, %159 : vector<16x128xi1>, vector<16x128xf32>
    %162 = arith.addf %156, %157 : vector<16x128xf32>
    %163 = arith.addf %162, %161 : vector<16x128xf32>
    %c6_78 = arith.constant 6 : index
    %c0_79 = arith.constant 0 : index
    %c0_80 = arith.constant 0 : index
    %164 = vector.load %arg3[%c6_78, %c0_79, %c0_80] : memref<8x16x1xf32, #tpu.memory_space<vmem>>, vector<1x16x1xf32>
    %165 = vector.shape_cast %164 : vector<1x16x1xf32> to vector<16x1xf32>
    %166 = vector.broadcast %165 : vector<16x1xf32> to vector<16x128xf32>
    %167 = arith.addf %163, %166 : vector<16x128xf32>
    %168 = arith.addf %167, %127 : vector<16x128xf32>
    %cst_81 = arith.constant 0.000000e+00 : f32
    %169 = vector.broadcast %cst_81 : f32 to vector<16x128xf32>
    %170 = arith.maximumf %168, %169 : vector<16x128xf32>
    %171 = arith.truncf %170 : vector<16x128xf32> to vector<16x128xbf16>
    %c7 = arith.constant 7 : index
    %c0_82 = arith.constant 0 : index
    %c0_83 = arith.constant 0 : index
    %172 = vector.load %arg2[%c7, %c0_82, %c0_83] : memref<8x48x16xbf16, #tpu.memory_space<vmem>>, vector<1x48x16xbf16>
    %173 = vector.shape_cast %172 : vector<1x48x16xbf16> to vector<48x16xbf16>
    %cst_84 = arith.constant dense<0.000000e+00> : vector<48x128xf32>
    %174 = tpu.matmul %173, %171, %cst_84 {dimension_numbers = #tpu.dot_dimension_numbers<[1], [0], [0], [1], [0, 0, 1, 1], [], []>} : vector<48x16xbf16>, vector<16x128xbf16>, vector<48x128xf32> -> vector<48x128xf32>
    %175 = vector.extract_strided_slice %174 {offsets = [0, 0], sizes = [16, 128], strides = [1, 1]} : vector<48x128xf32> to vector<16x128xf32>
    %c1_i32_85 = arith.constant 1 : i32
    %176 = tpu.dynamic_rotate %175 by %c1_i32_85 dim 1 : vector<16x128xf32>, i32 -> vector<16x128xf32>
    %cst_86 = arith.constant 0.000000e+00 : f32
    %177 = vector.broadcast %cst_86 : f32 to vector<16x128xf32>
    %178 = arith.select %18, %177, %176 : vector<16x128xi1>, vector<16x128xf32>
    %179 = vector.extract_strided_slice %174 {offsets = [16, 0], sizes = [16, 128], strides = [1, 1]} : vector<48x128xf32> to vector<16x128xf32>
    %180 = vector.extract_strided_slice %174 {offsets = [32, 0], sizes = [16, 128], strides = [1, 1]} : vector<48x128xf32> to vector<16x128xf32>
    %c127_i32_87 = arith.constant 127 : i32
    %181 = tpu.dynamic_rotate %180 by %c127_i32_87 dim 1 : vector<16x128xf32>, i32 -> vector<16x128xf32>
    %cst_88 = arith.constant 0.000000e+00 : f32
    %182 = vector.broadcast %cst_88 : f32 to vector<16x128xf32>
    %183 = arith.select %20, %182, %181 : vector<16x128xi1>, vector<16x128xf32>
    %184 = arith.addf %178, %179 : vector<16x128xf32>
    %185 = arith.addf %184, %183 : vector<16x128xf32>
    %c7_89 = arith.constant 7 : index
    %c0_90 = arith.constant 0 : index
    %c0_91 = arith.constant 0 : index
    %186 = vector.load %arg3[%c7_89, %c0_90, %c0_91] : memref<8x16x1xf32, #tpu.memory_space<vmem>>, vector<1x16x1xf32>
    %187 = vector.shape_cast %186 : vector<1x16x1xf32> to vector<16x1xf32>
    %188 = vector.broadcast %187 : vector<16x1xf32> to vector<16x128xf32>
    %189 = arith.addf %185, %188 : vector<16x128xf32>
    %cst_92 = arith.constant 0.000000e+00 : f32
    %190 = vector.broadcast %cst_92 : f32 to vector<16x128xf32>
    %191 = arith.maximumf %189, %190 : vector<16x128xf32>
    %c0_93 = arith.constant 0 : index
    %c0_94 = arith.constant 0 : index
    %192 = vector.load %arg4[%c0_93, %c0_94] : memref<16x128xf32, #tpu.memory_space<vmem>>, vector<16x128xf32>
    tpu.vector_store %arg4[%c0_93, %c0_94], %191 {strides = array<i32>} : memref<16x128xf32, #tpu.memory_space<vmem>>, vector<16x128xf32>,
    return
  }
  func.func @transform_0(%arg0: i32) -> (i32, i32) {
    %c0_i32 = arith.constant 0 : i32
    %c0_i32_0 = arith.constant 0 : i32
    return %c0_i32, %arg0 : i32, i32
  }
  func.func @transform_1(%arg0: i32) -> (i32, i32, i32) {
    %c0_i32 = arith.constant 0 : i32
    %c0_i32_0 = arith.constant 0 : i32
    %c0_i32_1 = arith.constant 0 : i32
    %c0_i32_2 = arith.constant 0 : i32
    return %c0_i32, %c0_i32_0, %c0_i32_1 : i32, i32, i32
  }
  func.func @transform_2(%arg0: i32) -> (i32, i32, i32) {
    %c0_i32 = arith.constant 0 : i32
    %c0_i32_0 = arith.constant 0 : i32
    %c0_i32_1 = arith.constant 0 : i32
    %c0_i32_2 = arith.constant 0 : i32
    return %c0_i32, %c0_i32_0, %c0_i32_1 : i32, i32, i32
  }
  func.func @transform_3(%arg0: i32) -> (i32, i32) {
    %c0_i32 = arith.constant 0 : i32
    %c0_i32_0 = arith.constant 0 : i32
    return %c0_i32, %arg0 : i32, i32
  }
}

</mosaic_0001>

<llo_original>
// kernel: tpu_custom_call.1
$region0: #{tpu_custom_call.1}
  #allocation0 [shape = 'u32[]', space=smem, size = 0x4, offset = 0x4, fixed_abs, tag = 'smem constant byte address 0x4 - core index']
  #allocation1 [shape = 'u32[144,128]{1,0:T(1,128)}', space=vmem, size = 0x12000, scoped, tag = 'internal scratch']
  %s0 = inlined_call_operand.vmem [shape: bf16[16,256], index: 0, kind: input, shape index: {}]
  %s1 = inlined_call_operand.vmem [shape: bf16[8,48,16], index: 1, kind: input, shape index: {}]
  %s2 = inlined_call_operand.vmem [shape: f32[8,16,1], index: 2, kind: input, shape index: {}]
  %s3 = inlined_call_operand.hbm [shape: f32[16,256], index: 3, kind: output, shape index: {}]
  %s4 = sld [smem:[#allocation0]]
  $region86: #{tpu_custom_call.1} parent=0
    _
  %s6 = ssub.s32 1, %s4
  %s7 = scalar_select 0, %s6, %s4
  $region1: #{tpu_custom_call.1} parent=0
    #allocation2 [shape = 'u8[8192]{0}', space=vmem, size = 0x2000, scoped, tag = 'input window, operand 0']
    #allocation3 [shape = 'u8[16384]{0}', space=vmem, size = 0x4000, scoped, tag = 'output window, operand 0']
    #allocation4 [shape = 's32[2]{0}', space=sflag, size = 0x8, scoped, tag = 'scoped memory for tpu_custom_call.1']
    %8 = vsyncpa [#allocation4], 0
    %s9 = scalar_lea.sflag [#allocation4], 1
    %10 = vsyncpa %s9, 0
    loop: start=0, step=1, limit=4
    $region2: #{tpu_custom_call.1} parent=1 // loop_pre_header
      _
    $region3: #{tpu_custom_call.1} parent=1 // loop_header
      %s12 = sphi 0, %s16
      %p13 = scmp.ge.s32.totalorder %s12, 4
      %s22 = sphi 0, %s24
      %s25 = sphi 0, %s22
      %s26 = sphi 0, %s25
      %s42 = sphi 0, %s26
      %s46 = sphi 0, %s46
      %s48 = sphi 0, %s46
      %s49 = sphi 0, %s48
      %s63 = sphi 0, %s49
      %s67 = sphi 0, %s67
      %s69 = sphi 0, %s67
      %s70 = sphi 0, %s69
      %s84 = sphi 0, %s70
      %s90 = sphi 0, %s92
      %s93 = sphi 0, %s90
      %s94 = sphi 0, %s93
      %s110 = sphi 0, %s94
    $region4: #{tpu_custom_call.1} parent=1 // loop_header_branch
      %15 = sbr.rel (%p13) target = $region8
    $region5: #{tpu_custom_call.1} parent=1 // loop_body
      %s17 = ssub.s32 %s12, 1
      %s18 = ssub.s32 %s12, 2
      %s19 = sadd.s32 %s12, 1
      %s20 = ssub.s32 %s12, %s19
      %p21 = scmp.eq.s32.totalorder %s20, 0
      %s23 = sadd.s32 %s22, 1
      %s24 = scalar_select %p21, %s22, %s23
      %p27 = pneg %p21
      %p28 = scmp.eq.s32.totalorder %s12, 1
      %p29 = por %p27, %p28
      %p30 = scmp.ne.s32.totalorder %s22, %s25
      %p31 = scmp.eq.s32.totalorder %s12, 0
      %p32 = por %p30, %p31
      %p33 = scmp.ne.s32.totalorder %s22, %s25
      %p34 = scmp.eq.s32.totalorder %s17, 1
      %p35 = por %p33, %p34
      %p36 = scmp.ne.s32.totalorder %s25, %s26
      %p37 = scmp.eq.s32.totalorder %s17, 0
      %p38 = por %p36, %p37
      %p39 = scmp.ne.s32.totalorder %s25, %s26
      %p40 = scmp.eq.s32.totalorder %s18, 1
      %p41 = por %p39, %p40
      %p43 = scmp.ne.s32.totalorder %s26, %s42
      %p44 = scmp.eq.s32.totalorder %s18, 0
      %p45 = por %p43, %p44
      %s47 = sadd.s32 %s46, 1
      %p50 = scmp.eq.s32.totalorder %s12, 1
      %p51 = scmp.ne.s32.totalorder %s46, %s48
      %p52 = scmp.eq.s32.totalorder %s12, 0
      %p53 = por %p51, %p52
      %p54 = scmp.ne.s32.totalorder %s46, %s48
      %p55 = scmp.eq.s32.totalorder %s17, 1
      %p56 = por %p54, %p55
      %p57 = scmp.ne.s32.totalorder %s48, %s49
      %p58 = scmp.eq.s32.totalorder %s17, 0
      %p59 = por %p57, %p58
      %p60 = scmp.ne.s32.totalorder %s48, %s49
      %p61 = scmp.eq.s32.totalorder %s18, 1
      %p62 = por %p60, %p61
      %p64 = scmp.ne.s32.totalorder %s49, %s63
      %p65 = scmp.eq.s32.totalorder %s18, 0
      %p66 = por %p64, %p65
      %s68 = sadd.s32 %s67, 1
      %p71 = scmp.eq.s32.totalorder %s12, 1
      %p72 = scmp.ne.s32.totalorder %s67, %s69
      %p73 = scmp.eq.s32.totalorder %s12, 0
      %p74 = por %p72, %p73
      %p75 = scmp.ne.s32.totalorder %s67, %s69
      %p76 = scmp.eq.s32.totalorder %s17, 1
      %p77 = por %p75, %p76
      %p78 = scmp.ne.s32.totalorder %s69, %s70
      %p79 = scmp.eq.s32.totalorder %s17, 0
      %p80 = por %p78, %p79
      %p81 = scmp.ne.s32.totalorder %s69, %s70
      %p82 = scmp.eq.s32.totalorder %s18, 1
      %p83 = por %p81, %p82
      %p85 = scmp.ne.s32.totalorder %s70, %s84
      %p86 = scmp.eq.s32.totalorder %s18, 0
      %p87 = por %p85, %p86
      %s88 = ssub.s32 %s12, %s19
      %p89 = scmp.eq.s32.totalorder %s88, 0
      %s91 = sadd.s32 %s90, 1
      %s92 = scalar_select %p89, %s90, %s91
      %p95 = pneg %p89
      %p96 = scmp.eq.s32.totalorder %s12, 1
      %p97 = por %p95, %p96
      %p98 = scmp.ne.s32.totalorder %s90, %s93
      %p99 = scmp.eq.s32.totalorder %s12, 0
      %p100 = por %p98, %p99
      %p101 = scmp.ne.s32.totalorder %s90, %s93
      %p102 = scmp.eq.s32.totalorder %s17, 1
      %p103 = por %p101, %p102
      %p104 = scmp.ne.s32.totalorder %s93, %s94
      %p105 = scmp.eq.s32.totalorder %s17, 0
      %p106 = por %p104, %p105
      %p107 = scmp.ne.s32.totalorder %s93, %s94
      %p108 = scmp.eq.s32.totalorder %s18, 1
      %p109 = por %p107, %p108
      %p111 = scmp.ne.s32.totalorder %s94, %s110
      %p112 = scmp.eq.s32.totalorder %s18, 0
      %p113 = por %p111, %p112
      %p114 = scmp.le.s32.totalorder 1, %s12
      %p115 = scmp.lt.s32.totalorder %s12, 3
      %p116 = pnand %p114, %p115
      %p117 = pneg %p116
      // Predicated region
      $region9: #{tpu_custom_call.1} parent=5 // pred_check
        _
      $region10: #{tpu_custom_call.1} parent=5 // pred_check_branch
        %119 = sbr.rel (%p116) target = $region12
      $region11: #{tpu_custom_call.1} parent=5 // pred_region
        %s120 = ssub.s32 %s12, 1
        // Predicated region
        $region13: #{tpu_custom_call.1} parent=11 // pred_check
          %p121 = pneg %p59
        $region14: #{tpu_custom_call.1} parent=11 // pred_check_branch
          %123 = sbr.rel (%p121) target = $region16
        $region15: #{tpu_custom_call.1} parent=11 // pred_region
          _
        $region16: #{tpu_custom_call.1} parent=11 // pred_fallthru
          _
        // Predicated region
        $region17: #{tpu_custom_call.1} parent=11 // pred_check
          %p124 = pneg %p80
        $region18: #{tpu_custom_call.1} parent=11 // pred_check_branch
          %126 = sbr.rel (%p124) target = $region20
        $region19: #{tpu_custom_call.1} parent=11 // pred_region
          _
        $region20: #{tpu_custom_call.1} parent=11 // pred_fallthru
          _
      $region12: #{tpu_custom_call.1} parent=5 // pred_fallthru
        _
      %p127 = scmp.lt.s32.totalorder %s12, 2
      // Predicated region
      $region21: #{tpu_custom_call.1} parent=5 // pred_check
        %p128 = pneg %p127
      $region22: #{tpu_custom_call.1} parent=5 // pred_check_branch
        %130 = sbr.rel (%p128) target = $region24
      $region23: #{tpu_custom_call.1} parent=5 // pred_region
        // Predicated region
        $region25: #{tpu_custom_call.1} parent=23 // pred_check
          %p131 = pneg %p32
        $region26: #{tpu_custom_call.1} parent=23 // pred_check_branch
          %133 = sbr.rel (%p131) target = $region28
        $region27: #{tpu_custom_call.1} parent=23 // pred_region
          %s134 = sand.u32 %s22, 1
          %s135 = sand.u32 %s22, 1
          %s136 = smul.addr %s135, 8
          %s137 = scalar_lea.vmem [#allocation2], %s136
          %s138 = smul.addr %s12, 4
          %s139 = scalar_lea.vmem %s0, %s138
          // Predicated region
          $region29: #{tpu_custom_call.1} parent=27 // pred_check
            _
          $region30: #{tpu_custom_call.1} parent=27 // pred_check_branch
            %141 = sbr.rel (0) target = $region32
          $region31: #{tpu_custom_call.1} parent=27 // pred_region
            // Predicated region
            $region33: #{tpu_custom_call.1} parent=31 // pred_check
              _
            $region34: #{tpu_custom_call.1} parent=31 // pred_check_branch
              %143 = sbr.rel target = $region36
            $region35: #{tpu_custom_call.1} parent=31 // pred_region
              // Predicated region
              $region48: #{tpu_custom_call.1} parent=35 // pred_check
                _
              $region49: #{tpu_custom_call.1} parent=35 // pred_check_branch
                %160 = sbr.rel (0) target = $region51
              $region50: #{tpu_custom_call.1} parent=35 // pred_region
                loop: start=0, step=1, limit=1
                $region52: #{tpu_custom_call.1} parent=50 // loop_pre_header
                  _
                $region53: #{tpu_custom_call.1} parent=50 // loop_header
                  %s162 = sphi 0, %s166
                  %p163 = scmp.ge.s32.totalorder %s162, 1
                  %s167 = sphi %s139, %s139
                  %s168 = sphi %s137, %s137
                $region54: #{tpu_custom_call.1} parent=50 // loop_header_branch
                  %165 = sbr.rel (%p163) target = $region58
                $region55: #{tpu_custom_call.1} parent=50 // loop_body
                  _
                $region56: #{tpu_custom_call.1} parent=50 // loop_footer
                  %s166 = sadd.s32 1, %s162
                $region57: #{tpu_custom_call.1} parent=50 // loop_footer_branch
                  %161 = sbr.rel target = $region53
                $region58: #{tpu_custom_call.1} parent=50 // loop_exit
                  _
                loop: start=0, step=1, limit=1
                $region59: #{tpu_custom_call.1} parent=50 // loop_pre_header
                  _
                $region60: #{tpu_custom_call.1} parent=50 // loop_header
                  %s171 = sphi 0, %s175
                  %p172 = scmp.ge.s32.totalorder %s171, 1
                  %s176 = sphi %s139, %s139
                  %s177 = sphi %s137, %s137
                $region61: #{tpu_custom_call.1} parent=50 // loop_header_branch
                  %174 = sbr.rel (%p172) target = $region65
                $region62: #{tpu_custom_call.1} parent=50 // loop_body
                  %v178 = vld [vmem:[%s176] sm:$0xf]
                  %179 = vst [vmem:[%s177] sm:$0xf] %v178
                  %v180 = vld [vmem:[%s176 + $0x8] sm:$0xf]
                  %181 = vst [vmem:[%s177 + $0x4] sm:$0xf] %v180
                $region63: #{tpu_custom_call.1} parent=50 // loop_footer
                  %s175 = sadd.s32 1, %s171
                $region64: #{tpu_custom_call.1} parent=50 // loop_footer_branch
                  %170 = sbr.rel target = $region60
                $region65: #{tpu_custom_call.1} parent=50 // loop_exit
                  _
              $region51: #{tpu_custom_call.1} parent=35 // pred_fallthru
                _
            $region36: #{tpu_custom_call.1} parent=31 // pred_fallthru
              _
            // Predicated region
            $region37: #{tpu_custom_call.1} parent=31 // pred_check
              _
            $region38: #{tpu_custom_call.1} parent=31 // pred_check_branch
              %145 = sbr.rel (0) target = $region40
            $region39: #{tpu_custom_call.1} parent=31 // pred_region
              loop: start=0, step=1, limit=1
              $region41: #{tpu_custom_call.1} parent=39 // loop_pre_header
                _
              $region42: #{tpu_custom_call.1} parent=39 // loop_header
                %s148 = sphi 0, %s152
                %p149 = scmp.ge.s32.totalorder %s148, 1
                %s153 = sphi %s139, %s139
                %s154 = sphi %s137, %s137
              $region43: #{tpu_custom_call.1} parent=39 // loop_header_branch
                %151 = sbr.rel (%p149) target = $region47
              $region44: #{tpu_custom_call.1} parent=39 // loop_body
                %v155 = vld [vmem:[%s153] sm:$0xf]
                %156 = vst [vmem:[%s154] sm:$0xf] %v155
                %v157 = vld [vmem:[%s153 + $0x8] sm:$0xf]
                %158 = vst [vmem:[%s154 + $0x4] sm:$0xf] %v157
              $region45: #{tpu_custom_call.1} parent=39 // loop_footer
                %s152 = sadd.s32 1, %s148
              $region46: #{tpu_custom_call.1} parent=39 // loop_footer_branch
                %147 = sbr.rel target = $region42
              $region47: #{tpu_custom_call.1} parent=39 // loop_exit
                _
            $region40: #{tpu_custom_call.1} parent=31 // pred_fallthru
              _
          $region32: #{tpu_custom_call.1} parent=27 // pred_fallthru
            _
          %182 = vnop
        $region28: #{tpu_custom_call.1} parent=23 // pred_fallthru
          _
      $region24: #{tpu_custom_call.1} parent=5 // pred_fallthru
        _
      %p183 = scmp.le.s32.totalorder 1, %s12
      %p184 = scmp.lt.s32.totalorder %s12, 3
      %p185 = pnand %p183, %p184
      %p186 = pneg %p185
      // Predicated region
      $region66: #{tpu_custom_call.1} parent=5 // pred_check
        _
      $region67: #{tpu_custom_call.1} parent=5 // pred_check_branch
        %188 = sbr.rel (%p185) target = $region69
      $region68: #{tpu_custom_call.1} parent=5 // pred_region
        %s189 = ssub.s32 %s12, 1
        %s190 = sand.u32 %s25, 1
        %s191 = sand.u32 %s25, 1
        %s192 = smul.addr %s191, 8
        %s193 = scalar_lea.vmem [#allocation2], %s192
        // Predicated region
        $region70: #{tpu_custom_call.1} parent=68 // pred_check
          %p194 = pneg %p38
        $region71: #{tpu_custom_call.1} parent=68 // pred_check_branch
          %196 = sbr.rel (%p194) target = $region73
        $region72: #{tpu_custom_call.1} parent=68 // pred_region
          _
        $region73: #{tpu_custom_call.1} parent=68 // pred_fallthru
          _
        %s197 = sand.u32 %s25, 1
        %s198 = sand.u32 %s25, 1
        %s199 = smul.addr %s198, 8
        %s200 = scalar_lea.vmem [#allocation2], %s199
        %p201 = pneg %p38
        %p202 = pneg %p35
        %p203 = pneg %p59
        %p204 = pneg %p56
        %p205 = pneg %p80
        %p206 = pneg %p77
        %p207 = pneg %p106
        %p208 = pneg %p103
        %s209 = sand.u32 %s93, 1
        %s210 = scalar_lea.sflag [#allocation4], %s209
        %s211 = sand.u32 %s93, 1
        %s212 = smul.addr %s211, 16
        %s213 = scalar_lea.vmem [#allocation3], %s212
        %v215 = vlaneseq
        %v216 = vand.u32 %v215, 127
        %vm217 = vcmp.lt.s32.totalorder %v216, 0
        %v218 = vsub.s32 0, %v216
        %v219 = vsel %vm217, %v218, %v216
        %v220 = vshrl.u32 %v219, 7
        %v221 = vand.u32 %v219, 127
        %v222 = vsub.s32 0, %v221
        %v223 = vsel %vm217, %v222, %v221
        %vm224 = vcmp.ne.s32.totalorder %v223, 0
        %vm225 = vcmp.lt.s32.totalorder %v223, 0
        %vm226 = vmand %vm225, %vm224
        %v227 = vadd.s32 %v223, 128
        %v228 = vsel %vm226, %v227, %v223
        %vm229 = vcmp.eq.s32.totalorder %v228, 0
        %vm230 = vcmp.eq.s32.totalorder %v228, 127
        %v231 = vld [vmem:[%s193] sm:$0xf]
        %v232 = vld [vmem:[%s193 + $0x4] sm:$0xf]
        %v233 = vld [vmem:[%s1] sm:$0xf]
        %v234 = vld [vmem:[%s1 + $0x4] sm:$0xf]
        %v235 = vld [vmem:[%s1 + $0x8] sm:$0xf]
        %v236 = vld [vmem:[%s1 + $0xc] sm:$0xf]
        %v237 = vld [vmem:[%s1 + $0x10] sm:$0xf]
        %v238 = vld [vmem:[%s1 + $0x14] sm:$0xf]
        %v245 = vunpack.c.l.b16 %v233
        %v246 = vunpack.c.l.b16 %v234
        %v247 = vunpack.c.l.b16 %v235
        %v248 = vunpack.c.l.b16 %v236
        %v249 = vunpack.c.l.b16 %v237
        %v250 = vunpack.c.l.b16 %v238
        %v251 = vpack.c.b16 %v246, %v245
        %v252 = vpack.c.b16 %v248, %v247
        %v253 = vpack.c.b16 %v250, %v249
        %v256 = vunpack.c.l.b16 %v231
        %v257 = vunpack.c.l.b16 %v232
        %v258 = vpack.c.b16 %v257, %v256
        %vm260 = vcmask 130048
        %v262 = vsel %vm260, %v251, 0
        %v265 = vsel %vm260, %v252, 0
        %v268 = vsel %vm260, %v253, 0
        %270 = vmatprep.subr.bf16.mxu0 0
        %271 = vmatpush1.bf16.msra.mxu0 %v258
        %272 = vmatprep.subr.bf16.mxu0 0
        %273 = vmatpush1.bf16.msra.mxu0 0
        %274 = vmatprep.subr.bf16.mxu0 0
        %275 = vmatpush1.bf16.msra.mxu0 0
        %276 = vmatprep.subr.bf16.mxu0 0
        %277 = vmatpush1.bf16.msra.mxu0 0
        %278 = vmatprep.subr.bf16.mxu0 0
        %279 = vmatpush1.bf16.msra.mxu0 0
        %280 = vmatprep.subr.bf16.mxu0 0
        %281 = vmatpush1.bf16.msra.mxu0 0
        %282 = vmatprep.subr.bf16.mxu0 0
        %283 = vmatpush1.bf16.msra.mxu0 0
        %284 = vmatprep.subr.bf16.mxu0 0
        %285 = vmatpush1.bf16.msra.mxu0 0
        %286 = vmatprep.subr.bf16.mxu0 0
        %287 = vmatpush1.bf16.msra.mxu0 0
        %288 = vmatprep.subr.bf16.mxu0 0
        %289 = vmatpush1.bf16.msra.mxu0 0
        %290 = vmatprep.subr.bf16.mxu0 0
        %291 = vmatpush1.bf16.msra.mxu0 0
        %292 = vmatprep.subr.bf16.mxu0 0
        %293 = vmatpush1.bf16.msra.mxu0 0
        %294 = vmatprep.subr.bf16.mxu0 0
        %295 = vmatpush1.bf16.msra.mxu0 0
        %296 = vmatprep.subr.bf16.mxu0 0
        %297 = vmatpush1.bf16.msra.mxu0 0
        %298 = vmatprep.subr.bf16.mxu0 0
        %299 = vmatpush1.bf16.msra.mxu0 0
        %300 = vmatprep.subr.bf16.mxu0 0
        %301 = vmatpush1.bf16.msra.mxu0 0
        %302 = vmatprep.mubr.bf16.mxu0 0
        %303 = vmatmul.mubr.bf16.gmra.mrb[0].mxu0 %v262
        %v304 = vpop.f32.mrb[0].mxu0
        %v305 = vadd.f32 0.0, %v304
        %v306 = vpop.f32.mrb[0].mxu0
        %v307 = vpop.f32.mrb[0].mxu0
        %v308 = vadd.f32 0.0, %v307
        %v309 = vpop.f32.mrb[0].mxu0
        %310 = vmatprep.mubr.bf16.mxu0 0
        %311 = vmatmul.mubr.bf16.gmra.mrb[0].mxu0 %v265
        %v312 = vpop.f32.mrb[0].mxu0
        %v313 = vadd.f32 0.0, %v312
        %v314 = vpop.f32.mrb[0].mxu0
        %v315 = vpop.f32.mrb[0].mxu0
        %v316 = vadd.f32 0.0, %v315
        %v317 = vpop.f32.mrb[0].mxu0
        %318 = vmatprep.mubr.bf16.mxu0 0
        %319 = vmatmul.mubr.bf16.gmra.mrb[0].mxu0 %v268
        %v320 = vpop.f32.mrb[0].mxu0
        %v321 = vadd.f32 0.0, %v320
        %v322 = vpop.f32.mrb[0].mxu0
        %v323 = vpop.f32.mrb[0].mxu0
        %v324 = vadd.f32 0.0, %v323
        %v325 = vpop.f32.mrb[0].mxu0
        %326 = vdwg.mxu0
        %327 = vrot.lane.b32.xlu0 %v305, 1
        %v328 = vpop.permute.xlu0 %327
        %329 = vrot.lane.b32.xlu0 %v308, 1
        %v330 = vpop.permute.xlu0 %329
        %v331 = vsel %vm229, 0.0, %v328
        %v332 = vsel %vm229, 0.0, %v330
        %333 = vrot.lane.b32.xlu0 %v321, 127
        %v334 = vpop.permute.xlu0 %333
        %335 = vrot.lane.b32.xlu0 %v324, 127
        %v336 = vpop.permute.xlu0 %335
        %v337 = vsel %vm230, 0.0, %v334
        %v338 = vsel %vm230, 0.0, %v336
        %v339 = vadd.f32 %v331, %v313
        %v340 = vadd.f32 %v332, %v316
        %v341 = vadd.f32 %v339, %v337
        %v342 = vadd.f32 %v340, %v338
        %v343 = vld [vmem:[%s2] sm:$0xff]
        %v344 = vld [vmem:[%s2 + $0x8] sm:$0xff]
        %346 = vset.pattern.permute.xlu0 0
        %347 = vperm.xlu0 %346, %v343
        %v348 = vpop.permute.xlu0 %347
        %351 = vset.pattern.permute.xlu0 0
        %352 = vperm.xlu0 %351, %v344
        %v353 = vpop.permute.xlu0 %352
        %v355 = vadd.f32 %v341, %v348
        %v356 = vadd.f32 %v342, %v353
        %v357 = vmax.f32 %v355, 0.0
        %v358 = vmax.f32 %v356, 0.0
        %v359 = vpack.c.bf16 %v358, %v357
        %s360 = scalar_lea.vmem %s1, 24
        %v361 = vld [vmem:[%s360] sm:$0xf]
        %v362 = vld [vmem:[%s360 + $0x4] sm:$0xf]
        %v363 = vld [vmem:[%s360 + $0x8] sm:$0xf]
        %v364 = vld [vmem:[%s360 + $0xc] sm:$0xf]
        %v365 = vld [vmem:[%s360 + $0x10] sm:$0xf]
        %v366 = vld [vmem:[%s360 + $0x14] sm:$0xf]
        %v373 = vunpack.c.l.b16 %v361
        %v374 = vunpack.c.l.b16 %v362
        %v375 = vunpack.c.l.b16 %v363
        %v376 = vunpack.c.l.b16 %v364
        %v377 = vunpack.c.l.b16 %v365
        %v378 = vunpack.c.l.b16 %v366
        %v379 = vpack.c.b16 %v374, %v373
        %v380 = vpack.c.b16 %v376, %v375
        %v381 = vpack.c.b16 %v378, %v377
        %v383 = vsel %vm260, %v379, 0
        %v386 = vsel %vm260, %v380, 0
        %v389 = vsel %vm260, %v381, 0
        %391 = vmatprep.subr.bf16.mxu0 0
        %392 = vmatpush1.bf16.msra.mxu0 %v359
        %393 = vmatprep.subr.bf16.mxu0 0
        %394 = vmatpush1.bf16.msra.mxu0 0
        %395 = vmatprep.subr.bf16.mxu0 0
        %396 = vmatpush1.bf16.msra.mxu0 0
        %397 = vmatprep.subr.bf16.mxu0 0
        %398 = vmatpush1.bf16.msra.mxu0 0
        %399 = vmatprep.subr.bf16.mxu0 0
        %400 = vmatpush1.bf16.msra.mxu0 0
        %401 = vmatprep.subr.bf16.mxu0 0
        %402 = vmatpush1.bf16.msra.mxu0 0
        %403 = vmatprep.subr.bf16.mxu0 0
        %404 = vmatpush1.bf16.msra.mxu0 0
        %405 = vmatprep.subr.bf16.mxu0 0
        %406 = vmatpush1.bf16.msra.mxu0 0
        %407 = vmatprep.subr.bf16.mxu0 0
        %408 = vmatpush1.bf16.msra.mxu0 0
        %409 = vmatprep.subr.bf16.mxu0 0
        %410 = vmatpush1.bf16.msra.mxu0 0
        %411 = vmatprep.subr.bf16.mxu0 0
        %412 = vmatpush1.bf16.msra.mxu0 0
        %413 = vmatprep.subr.bf16.mxu0 0
        %414 = vmatpush1.bf16.msra.mxu0 0
        %415 = vmatprep.subr.bf16.mxu0 0
        %416 = vmatpush1.bf16.msra.mxu0 0
        %417 = vmatprep.subr.bf16.mxu0 0
        %418 = vmatpush1.bf16.msra.mxu0 0
        %419 = vmatprep.subr.bf16.mxu0 0
        %420 = vmatpush1.bf16.msra.mxu0 0
        %421 = vmatprep.subr.bf16.mxu0 0
        %422 = vmatpush1.bf16.msra.mxu0 0
        %423 = vmatprep.mubr.bf16.mxu0 0
        %424 = vmatmul.mubr.bf16.gmra.mrb[0].mxu0 %v383
        %v425 = vpop.f32.mrb[0].mxu0
        %v426 = vadd.f32 0.0, %v425
        %v427 = vpop.f32.mrb[0].mxu0
        %v428 = vpop.f32.mrb[0].mxu0
        %v429 = vadd.f32 0.0, %v428
        %v430 = vpop.f32.mrb[0].mxu0
        %431 = vmatprep.mubr.bf16.mxu0 0
        %432 = vmatmul.mubr.bf16.gmra.mrb[0].mxu0 %v386
        %v433 = vpop.f32.mrb[0].mxu0
        %v434 = vadd.f32 0.0, %v433
        %v435 = vpop.f32.mrb[0].mxu0
        %v436 = vpop.f32.mrb[0].mxu0
        %v437 = vadd.f32 0.0, %v436
        %v438 = vpop.f32.mrb[0].mxu0
        %439 = vmatprep.mubr.bf16.mxu0 0
        %440 = vmatmul.mubr.bf16.gmra.mrb[0].mxu0 %v389
        %v441 = vpop.f32.mrb[0].mxu0
        %v442 = vadd.f32 0.0, %v441
        %v443 = vpop.f32.mrb[0].mxu0
        %v444 = vpop.f32.mrb[0].mxu0
        %v445 = vadd.f32 0.0, %v444
        %v446 = vpop.f32.mrb[0].mxu0
        %447 = vdwg.mxu0
        %448 = vrot.lane.b32.xlu0 %v426, 1
        %v449 = vpop.permute.xlu0 %448
        %450 = vrot.lane.b32.xlu0 %v429, 1
        %v451 = vpop.permute.xlu0 %450
        %v452 = vsel %vm229, 0.0, %v449
        %v453 = vsel %vm229, 0.0, %v451
        %454 = vrot.lane.b32.xlu0 %v442, 127
        %v455 = vpop.permute.xlu0 %454
        %456 = vrot.lane.b32.xlu0 %v445, 127
        %v457 = vpop.permute.xlu0 %456
        %v458 = vsel %vm230, 0.0, %v455
        %v459 = vsel %vm230, 0.0, %v457
        %v460 = vadd.f32 %v452, %v434
        %v461 = vadd.f32 %v453, %v437
        %v462 = vadd.f32 %v460, %v458
        %v463 = vadd.f32 %v461, %v459
        %s464 = scalar_lea.vmem %s2, 16
        %v465 = vld [vmem:[%s464] sm:$0xff]
        %v466 = vld [vmem:[%s464 + $0x8] sm:$0xff]
        %468 = vset.pattern.permute.xlu0 0
        %469 = vperm.xlu0 %468, %v465
        %v470 = vpop.permute.xlu0 %469
        %473 = vset.pattern.permute.xlu0 0
        %474 = vperm.xlu0 %473, %v466
        %v475 = vpop.permute.xlu0 %474
        %v477 = vadd.f32 %v462, %v470
        %v478 = vadd.f32 %v463, %v475
        %v479 = vmax.f32 %v477, 0.0
        %v480 = vmax.f32 %v478, 0.0
        %v481 = vpack.c.bf16 %v480, %v479
        %s482 = scalar_lea.vmem %s1, 48
        %v483 = vld [vmem:[%s482] sm:$0xf]
        %v484 = vld [vmem:[%s482 + $0x4] sm:$0xf]
        %v485 = vld [vmem:[%s482 + $0x8] sm:$0xf]
        %v486 = vld [vmem:[%s482 + $0xc] sm:$0xf]
        %v487 = vld [vmem:[%s482 + $0x10] sm:$0xf]
        %v488 = vld [vmem:[%s482 + $0x14] sm:$0xf]
        %v495 = vunpack.c.l.b16 %v483
        %v496 = vunpack.c.l.b16 %v484
        %v497 = vunpack.c.l.b16 %v485
        %v498 = vunpack.c.l.b16 %v486
        %v499 = vunpack.c.l.b16 %v487
        %v500 = vunpack.c.l.b16 %v488
        %v501 = vpack.c.b16 %v496, %v495
        %v502 = vpack.c.b16 %v498, %v497
        %v503 = vpack.c.b16 %v500, %v499
        %v505 = vsel %vm260, %v501, 0
        %v508 = vsel %vm260, %v502, 0
        %v511 = vsel %vm260, %v503, 0
        %513 = vmatprep.subr.bf16.mxu0 0
        %514 = vmatpush1.bf16.msra.mxu0 %v481
        %515 = vmatprep.subr.bf16.mxu0 0
        %516 = vmatpush1.bf16.msra.mxu0 0
        %517 = vmatprep.subr.bf16.mxu0 0
        %518 = vmatpush1.bf16.msra.mxu0 0
        %519 = vmatprep.subr.bf16.mxu0 0
        %520 = vmatpush1.bf16.msra.mxu0 0
        %521 = vmatprep.subr.bf16.mxu0 0
        %522 = vmatpush1.bf16.msra.mxu0 0
        %523 = vmatprep.subr.bf16.mxu0 0
        %524 = vmatpush1.bf16.msra.mxu0 0
        %525 = vmatprep.subr.bf16.mxu0 0
        %526 = vmatpush1.bf16.msra.mxu0 0
        %527 = vmatprep.subr.bf16.mxu0 0
        %528 = vmatpush1.bf16.msra.mxu0 0
        %529 = vmatprep.subr.bf16.mxu0 0
        %530 = vmatpush1.bf16.msra.mxu0 0
        %531 = vmatprep.subr.bf16.mxu0 0
        %532 = vmatpush1.bf16.msra.mxu0 0
        %533 = vmatprep.subr.bf16.mxu0 0
        %534 = vmatpush1.bf16.msra.mxu0 0
        %535 = vmatprep.subr.bf16.mxu0 0
        %536 = vmatpush1.bf16.msra.mxu0 0
        %537 = vmatprep.subr.bf16.mxu0 0
        %538 = vmatpush1.bf16.msra.mxu0 0
        %539 = vmatprep.subr.bf16.mxu0 0
        %540 = vmatpush1.bf16.msra.mxu0 0
        %541 = vmatprep.subr.bf16.mxu0 0
        %542 = vmatpush1.bf16.msra.mxu0 0
        %543 = vmatprep.subr.bf16.mxu0 0
        %544 = vmatpush1.bf16.msra.mxu0 0
        %545 = vmatprep.mubr.bf16.mxu0 0
        %546 = vmatmul.mubr.bf16.gmra.mrb[0].mxu0 %v505
        %v547 = vpop.f32.mrb[0].mxu0
        %v548 = vadd.f32 0.0, %v547
        %v549 = vpop.f32.mrb[0].mxu0
        %v550 = vpop.f32.mrb[0].mxu0
        %v551 = vadd.f32 0.0, %v550
        %v552 = vpop.f32.mrb[0].mxu0
        %553 = vmatprep.mubr.bf16.mxu0 0
        %554 = vmatmul.mubr.bf16.gmra.mrb[0].mxu0 %v508
        %v555 = vpop.f32.mrb[0].mxu0
        %v556 = vadd.f32 0.0, %v555
        %v557 = vpop.f32.mrb[0].mxu0
        %v558 = vpop.f32.mrb[0].mxu0
        %v559 = vadd.f32 0.0, %v558
        %v560 = vpop.f32.mrb[0].mxu0
        %561 = vmatprep.mubr.bf16.mxu0 0
        %562 = vmatmul.mubr.bf16.gmra.mrb[0].mxu0 %v511
        %v563 = vpop.f32.mrb[0].mxu0
        %v564 = vadd.f32 0.0, %v563
        %v565 = vpop.f32.mrb[0].mxu0
        %v566 = vpop.f32.mrb[0].mxu0
        %v567 = vadd.f32 0.0, %v566
        %v568 = vpop.f32.mrb[0].mxu0
        %569 = vdwg.mxu0
        %570 = vrot.lane.b32.xlu0 %v548, 1
        %v571 = vpop.permute.xlu0 %570
        %572 = vrot.lane.b32.xlu0 %v551, 1
        %v573 = vpop.permute.xlu0 %572
        %v574 = vsel %vm229, 0.0, %v571
        %v575 = vsel %vm229, 0.0, %v573
        %576 = vrot.lane.b32.xlu0 %v564, 127
        %v577 = vpop.permute.xlu0 %576
        %578 = vrot.lane.b32.xlu0 %v567, 127
        %v579 = vpop.permute.xlu0 %578
        %v580 = vsel %vm230, 0.0, %v577
        %v581 = vsel %vm230, 0.0, %v579
        %v582 = vadd.f32 %v574, %v556
        %v583 = vadd.f32 %v575, %v559
        %v584 = vadd.f32 %v582, %v580
        %v585 = vadd.f32 %v583, %v581
        %s586 = scalar_lea.vmem %s2, 32
        %v587 = vld [vmem:[%s586] sm:$0xff]
        %v588 = vld [vmem:[%s586 + $0x8] sm:$0xff]
        %590 = vset.pattern.permute.xlu0 0
        %591 = vperm.xlu0 %590, %v587
        %v592 = vpop.permute.xlu0 %591
        %595 = vset.pattern.permute.xlu0 0
        %596 = vperm.xlu0 %595, %v588
        %v597 = vpop.permute.xlu0 %596
        %v599 = vadd.f32 %v584, %v592
        %v600 = vadd.f32 %v585, %v597
        %v601 = vadd.f32 %v599, %v357
        %v602 = vadd.f32 %v600, %v358
        %v603 = vmax.f32 %v601, 0.0
        %v604 = vmax.f32 %v602, 0.0
        %v605 = vpack.c.bf16 %v604, %v603
        %s606 = scalar_lea.vmem %s1, 72
        %v607 = vld [vmem:[%s606] sm:$0xf]
        %v608 = vld [vmem:[%s606 + $0x4] sm:$0xf]
        %v609 = vld [vmem:[%s606 + $0x8] sm:$0xf]
        %v610 = vld [vmem:[%s606 + $0xc] sm:$0xf]
        %v611 = vld [vmem:[%s606 + $0x10] sm:$0xf]
        %v612 = vld [vmem:[%s606 + $0x14] sm:$0xf]
        %v619 = vunpack.c.l.b16 %v607
        %v620 = vunpack.c.l.b16 %v608
        %v621 = vunpack.c.l.b16 %v609
        %v622 = vunpack.c.l.b16 %v610
        %v623 = vunpack.c.l.b16 %v611
        %v624 = vunpack.c.l.b16 %v612
        %v625 = vpack.c.b16 %v620, %v619
        %v626 = vpack.c.b16 %v622, %v621
        %v627 = vpack.c.b16 %v624, %v623
        %v629 = vsel %vm260, %v625, 0
        %v632 = vsel %vm260, %v626, 0
        %v635 = vsel %vm260, %v627, 0
        %637 = vmatprep.subr.bf16.mxu0 0
        %638 = vmatpush1.bf16.msra.mxu0 %v605
        %639 = vmatprep.subr.bf16.mxu0 0
        %640 = vmatpush1.bf16.msra.mxu0 0
        %641 = vmatprep.subr.bf16.mxu0 0
        %642 = vmatpush1.bf16.msra.mxu0 0
        %643 = vmatprep.subr.bf16.mxu0 0
        %644 = vmatpush1.bf16.msra.mxu0 0
        %645 = vmatprep.subr.bf16.mxu0 0
        %646 = vmatpush1.bf16.msra.mxu0 0
        %647 = vmatprep.subr.bf16.mxu0 0
        %648 = vmatpush1.bf16.msra.mxu0 0
        %649 = vmatprep.subr.bf16.mxu0 0
        %650 = vmatpush1.bf16.msra.mxu0 0
        %651 = vmatprep.subr.bf16.mxu0 0
        %652 = vmatpush1.bf16.msra.mxu0 0
        %653 = vmatprep.subr.bf16.mxu0 0
        %654 = vmatpush1.bf16.msra.mxu0 0
        %655 = vmatprep.subr.bf16.mxu0 0
        %656 = vmatpush1.bf16.msra.mxu0 0
        %657 = vmatprep.subr.bf16.mxu0 0
        %658 = vmatpush1.bf16.msra.mxu0 0
        %659 = vmatprep.subr.bf16.mxu0 0
        %660 = vmatpush1.bf16.msra.mxu0 0
        %661 = vmatprep.subr.bf16.mxu0 0
        %662 = vmatpush1.bf16.msra.mxu0 0
        %663 = vmatprep.subr.bf16.mxu0 0
        %664 = vmatpush1.bf16.msra.mxu0 0
        %665 = vmatprep.subr.bf16.mxu0 0
        %666 = vmatpush1.bf16.msra.mxu0 0
        %667 = vmatprep.subr.bf16.mxu0 0
        %668 = vmatpush1.bf16.msra.mxu0 0
        %669 = vmatprep.mubr.bf16.mxu0 0
        %670 = vmatmul.mubr.bf16.gmra.mrb[0].mxu0 %v629
        %v671 = vpop.f32.mrb[0].mxu0
        %v672 = vadd.f32 0.0, %v671
        %v673 = vpop.f32.mrb[0].mxu0
        %v674 = vpop.f32.mrb[0].mxu0
        %v675 = vadd.f32 0.0, %v674
        %v676 = vpop.f32.mrb[0].mxu0
        %677 = vmatprep.mubr.bf16.mxu0 0
        %678 = vmatmul.mubr.bf16.gmra.mrb[0].mxu0 %v632
        %v679 = vpop.f32.mrb[0].mxu0
        %v680 = vadd.f32 0.0, %v679
        %v681 = vpop.f32.mrb[0].mxu0
        %v682 = vpop.f32.mrb[0].mxu0
        %v683 = vadd.f32 0.0, %v682
        %v684 = vpop.f32.mrb[0].mxu0
        %685 = vmatprep.mubr.bf16.mxu0 0
        %686 = vmatmul.mubr.bf16.gmra.mrb[0].mxu0 %v635
        %v687 = vpop.f32.mrb[0].mxu0
        %v688 = vadd.f32 0.0, %v687
        %v689 = vpop.f32.mrb[0].mxu0
        %v690 = vpop.f32.mrb[0].mxu0
        %v691 = vadd.f32 0.0, %v690
        %v692 = vpop.f32.mrb[0].mxu0
        %693 = vdwg.mxu0
        %694 = vrot.lane.b32.xlu0 %v672, 1
        %v695 = vpop.permute.xlu0 %694
        %696 = vrot.lane.b32.xlu0 %v675, 1
        %v697 = vpop.permute.xlu0 %696
        %v698 = vsel %vm229, 0.0, %v695
        %v699 = vsel %vm229, 0.0, %v697
        %700 = vrot.lane.b32.xlu0 %v688, 127
        %v701 = vpop.permute.xlu0 %700
        %702 = vrot.lane.b32.xlu0 %v691, 127
        %v703 = vpop.permute.xlu0 %702
        %v704 = vsel %vm230, 0.0, %v701
        %v705 = vsel %vm230, 0.0, %v703
        %v706 = vadd.f32 %v698, %v680
        %v707 = vadd.f32 %v699, %v683
        %v708 = vadd.f32 %v706, %v704
        %v709 = vadd.f32 %v707, %v705
        %s710 = scalar_lea.vmem %s2, 48
        %v711 = vld [vmem:[%s710] sm:$0xff]
        %v712 = vld [vmem:[%s710 + $0x8] sm:$0xff]
        %714 = vset.pattern.permute.xlu0 0
        %715 = vperm.xlu0 %714, %v711
        %v716 = vpop.permute.xlu0 %715
        %719 = vset.pattern.permute.xlu0 0
        %720 = vperm.xlu0 %719, %v712
        %v721 = vpop.permute.xlu0 %720
        %v723 = vadd.f32 %v708, %v716
        %v724 = vadd.f32 %v709, %v721
        %v725 = vmax.f32 %v723, 0.0
        %v726 = vmax.f32 %v724, 0.0
        %v727 = vpack.c.bf16 %v726, %v725
        %s728 = scalar_lea.vmem %s1, 96
        %v729 = vld [vmem:[%s728] sm:$0xf]
        %v730 = vld [vmem:[%s728 + $0x4] sm:$0xf]
        %v731 = vld [vmem:[%s728 + $0x8] sm:$0xf]
        %v732 = vld [vmem:[%s728 + $0xc] sm:$0xf]
        %v733 = vld [vmem:[%s728 + $0x10] sm:$0xf]
        %v734 = vld [vmem:[%s728 + $0x14] sm:$0xf]
        %v741 = vunpack.c.l.b16 %v729
        %v742 = vunpack.c.l.b16 %v730
        %v743 = vunpack.c.l.b16 %v731
        %v744 = vunpack.c.l.b16 %v732
        %v745 = vunpack.c.l.b16 %v733
        %v746 = vunpack.c.l.b16 %v734
        %v747 = vpack.c.b16 %v742, %v741
        %v748 = vpack.c.b16 %v744, %v743
        %v749 = vpack.c.b16 %v746, %v745
        %v751 = vsel %vm260, %v747, 0
        %v754 = vsel %vm260, %v748, 0
        %v757 = vsel %vm260, %v749, 0
        %759 = vmatprep.subr.bf16.mxu0 0
        %760 = vmatpush1.bf16.msra.mxu0 %v727
        %761 = vmatprep.subr.bf16.mxu0 0
        %762 = vmatpush1.bf16.msra.mxu0 0
        %763 = vmatprep.subr.bf16.mxu0 0
        %764 = vmatpush1.bf16.msra.mxu0 0
        %765 = vmatprep.subr.bf16.mxu0 0
        %766 = vmatpush1.bf16.msra.mxu0 0
        %767 = vmatprep.subr.bf16.mxu0 0
        %768 = vmatpush1.bf16.msra.mxu0 0
        %769 = vmatprep.subr.bf16.mxu0 0
        %770 = vmatpush1.bf16.msra.mxu0 0
        %771 = vmatprep.subr.bf16.mxu0 0
        %772 = vmatpush1.bf16.msra.mxu0 0
        %773 = vmatprep.subr.bf16.mxu0 0
        %774 = vmatpush1.bf16.msra.mxu0 0
        %775 = vmatprep.subr.bf16.mxu0 0
        %776 = vmatpush1.bf16.msra.mxu0 0
        %777 = vmatprep.subr.bf16.mxu0 0
        %778 = vmatpush1.bf16.msra.mxu0 0
        %779 = vmatprep.subr.bf16.mxu0 0
        %780 = vmatpush1.bf16.msra.mxu0 0
        %781 = vmatprep.subr.bf16.mxu0 0
        %782 = vmatpush1.bf16.msra.mxu0 0
        %783 = vmatprep.subr.bf16.mxu0 0
        %784 = vmatpush1.bf16.msra.mxu0 0
        %785 = vmatprep.subr.bf16.mxu0 0
        %786 = vmatpush1.bf16.msra.mxu0 0
        %787 = vmatprep.subr.bf16.mxu0 0
        %788 = vmatpush1.bf16.msra.mxu0 0
        %789 = vmatprep.subr.bf16.mxu0 0
        %790 = vmatpush1.bf16.msra.mxu0 0
        %791 = vmatprep.mubr.bf16.mxu0 0
        %792 = vmatmul.mubr.bf16.gmra.mrb[0].mxu0 %v751
        %v793 = vpop.f32.mrb[0].mxu0
        %v794 = vadd.f32 0.0, %v793
        %v795 = vpop.f32.mrb[0].mxu0
        %v796 = vpop.f32.mrb[0].mxu0
        %v797 = vadd.f32 0.0, %v796
        %v798 = vpop.f32.mrb[0].mxu0
        %799 = vmatprep.mubr.bf16.mxu0 0
        %800 = vmatmul.mubr.bf16.gmra.mrb[0].mxu0 %v754
        %v801 = vpop.f32.mrb[0].mxu0
        %v802 = vadd.f32 0.0, %v801
        %v803 = vpop.f32.mrb[0].mxu0
        %v804 = vpop.f32.mrb[0].mxu0
        %v805 = vadd.f32 0.0, %v804
        %v806 = vpop.f32.mrb[0].mxu0
        %807 = vmatprep.mubr.bf16.mxu0 0
        %808 = vmatmul.mubr.bf16.gmra.mrb[0].mxu0 %v757
        %v809 = vpop.f32.mrb[0].mxu0
        %v810 = vadd.f32 0.0, %v809
        %v811 = vpop.f32.mrb[0].mxu0
        %v812 = vpop.f32.mrb[0].mxu0
        %v813 = vadd.f32 0.0, %v812
        %v814 = vpop.f32.mrb[0].mxu0
        %815 = vdwg.mxu0
        %816 = vrot.lane.b32.xlu0 %v794, 1
        %v817 = vpop.permute.xlu0 %816
        %818 = vrot.lane.b32.xlu0 %v797, 1
        %v819 = vpop.permute.xlu0 %818
        %v820 = vsel %vm229, 0.0, %v817
        %v821 = vsel %vm229, 0.0, %v819
        %822 = vrot.lane.b32.xlu0 %v810, 127
        %v823 = vpop.permute.xlu0 %822
        %824 = vrot.lane.b32.xlu0 %v813, 127
        %v825 = vpop.permute.xlu0 %824
        %v826 = vsel %vm230, 0.0, %v823
        %v827 = vsel %vm230, 0.0, %v825
        %v828 = vadd.f32 %v820, %v802
        %v829 = vadd.f32 %v821, %v805
        %v830 = vadd.f32 %v828, %v826
        %v831 = vadd.f32 %v829, %v827
        %s832 = scalar_lea.vmem %s2, 64
        %v833 = vld [vmem:[%s832] sm:$0xff]
        %v834 = vld [vmem:[%s832 + $0x8] sm:$0xff]
        %836 = vset.pattern.permute.xlu0 0
        %837 = vperm.xlu0 %836, %v833
        %v838 = vpop.permute.xlu0 %837
        %841 = vset.pattern.permute.xlu0 0
        %842 = vperm.xlu0 %841, %v834
        %v843 = vpop.permute.xlu0 %842
        %v845 = vadd.f32 %v830, %v838
        %v846 = vadd.f32 %v831, %v843
        %v847 = vadd.f32 %v845, %v603
        %v848 = vadd.f32 %v846, %v604
        %v849 = vmax.f32 %v847, 0.0
        %v850 = vmax.f32 %v848, 0.0
        %v851 = vpack.c.bf16 %v850, %v849
        %s852 = scalar_lea.vmem %s1, 120
        %v853 = vld [vmem:[%s852] sm:$0xf]
        %v854 = vld [vmem:[%s852 + $0x4] sm:$0xf]
        %v855 = vld [vmem:[%s852 + $0x8] sm:$0xf]
        %v856 = vld [vmem:[%s852 + $0xc] sm:$0xf]
        %v857 = vld [vmem:[%s852 + $0x10] sm:$0xf]
        %v858 = vld [vmem:[%s852 + $0x14] sm:$0xf]
        %v865 = vunpack.c.l.b16 %v853
        %v866 = vunpack.c.l.b16 %v854
        %v867 = vunpack.c.l.b16 %v855
        %v868 = vunpack.c.l.b16 %v856
        %v869 = vunpack.c.l.b16 %v857
        %v870 = vunpack.c.l.b16 %v858
        %v871 = vpack.c.b16 %v866, %v865
        %v872 = vpack.c.b16 %v868, %v867
        %v873 = vpack.c.b16 %v870, %v869
        %v875 = vsel %vm260, %v871, 0
        %v878 = vsel %vm260, %v872, 0
        %v881 = vsel %vm260, %v873, 0
        %883 = vmatprep.subr.bf16.mxu0 0
        %884 = vmatpush1.bf16.msra.mxu0 %v851
        %885 = vmatprep.subr.bf16.mxu0 0
        %886 = vmatpush1.bf16.msra.mxu0 0
        %887 = vmatprep.subr.bf16.mxu0 0
        %888 = vmatpush1.bf16.msra.mxu0 0
        %889 = vmatprep.subr.bf16.mxu0 0
        %890 = vmatpush1.bf16.msra.mxu0 0
        %891 = vmatprep.subr.bf16.mxu0 0
        %892 = vmatpush1.bf16.msra.mxu0 0
        %893 = vmatprep.subr.bf16.mxu0 0
        %894 = vmatpush1.bf16.msra.mxu0 0
        %895 = vmatprep.subr.bf16.mxu0 0
        %896 = vmatpush1.bf16.msra.mxu0 0
        %897 = vmatprep.subr.bf16.mxu0 0
        %898 = vmatpush1.bf16.msra.mxu0 0
        %899 = vmatprep.subr.bf16.mxu0 0
        %900 = vmatpush1.bf16.msra.mxu0 0
        %901 = vmatprep.subr.bf16.mxu0 0
        %902 = vmatpush1.bf16.msra.mxu0 0
        %903 = vmatprep.subr.bf16.mxu0 0
        %904 = vmatpush1.bf16.msra.mxu0 0
        %905 = vmatprep.subr.bf16.mxu0 0
        %906 = vmatpush1.bf16.msra.mxu0 0
        %907 = vmatprep.subr.bf16.mxu0 0
        %908 = vmatpush1.bf16.msra.mxu0 0
        %909 = vmatprep.subr.bf16.mxu0 0
        %910 = vmatpush1.bf16.msra.mxu0 0
        %911 = vmatprep.subr.bf16.mxu0 0
        %912 = vmatpush1.bf16.msra.mxu0 0
        %913 = vmatprep.subr.bf16.mxu0 0
        %914 = vmatpush1.bf16.msra.mxu0 0
        %915 = vmatprep.mubr.bf16.mxu0 0
        %916 = vmatmul.mubr.bf16.gmra.mrb[0].mxu0 %v875
        %v917 = vpop.f32.mrb[0].mxu0
        %v918 = vadd.f32 0.0, %v917
        %v919 = vpop.f32.mrb[0].mxu0
        %v920 = vpop.f32.mrb[0].mxu0
        %v921 = vadd.f32 0.0, %v920
        %v922 = vpop.f32.mrb[0].mxu0
        %923 = vmatprep.mubr.bf16.mxu0 0
        %924 = vmatmul.mubr.bf16.gmra.mrb[0].mxu0 %v878
        %v925 = vpop.f32.mrb[0].mxu0
        %v926 = vadd.f32 0.0, %v925
        %v927 = vpop.f32.mrb[0].mxu0
        %v928 = vpop.f32.mrb[0].mxu0
        %v929 = vadd.f32 0.0, %v928
        %v930 = vpop.f32.mrb[0].mxu0
        %931 = vmatprep.mubr.bf16.mxu0 0
        %932 = vmatmul.mubr.bf16.gmra.mrb[0].mxu0 %v881
        %v933 = vpop.f32.mrb[0].mxu0
        %v934 = vadd.f32 0.0, %v933
        %v935 = vpop.f32.mrb[0].mxu0
        %v936 = vpop.f32.mrb[0].mxu0
        %v937 = vadd.f32 0.0, %v936
        %v938 = vpop.f32.mrb[0].mxu0
        %939 = vdwg.mxu0
        %940 = vrot.lane.b32.xlu0 %v918, 1
        %v941 = vpop.permute.xlu0 %940
        %942 = vrot.lane.b32.xlu0 %v921, 1
        %v943 = vpop.permute.xlu0 %942
        %v944 = vsel %vm229, 0.0, %v941
        %v945 = vsel %vm229, 0.0, %v943
        %946 = vrot.lane.b32.xlu0 %v934, 127
        %v947 = vpop.permute.xlu0 %946
        %948 = vrot.lane.b32.xlu0 %v937, 127
        %v949 = vpop.permute.xlu0 %948
        %v950 = vsel %vm230, 0.0, %v947
        %v951 = vsel %vm230, 0.0, %v949
        %v952 = vadd.f32 %v944, %v926
        %v953 = vadd.f32 %v945, %v929
        %v954 = vadd.f32 %v952, %v950
        %v955 = vadd.f32 %v953, %v951
        %s956 = scalar_lea.vmem %s2, 80
        %v957 = vld [vmem:[%s956] sm:$0xff]
        %v958 = vld [vmem:[%s956 + $0x8] sm:$0xff]
        %960 = vset.pattern.permute.xlu0 0
        %961 = vperm.xlu0 %960, %v957
        %v962 = vpop.permute.xlu0 %961
        %965 = vset.pattern.permute.xlu0 0
        %966 = vperm.xlu0 %965, %v958
        %v967 = vpop.permute.xlu0 %966
        %v969 = vadd.f32 %v954, %v962
        %v970 = vadd.f32 %v955, %v967
        %v971 = vmax.f32 %v969, 0.0
        %v972 = vmax.f32 %v970, 0.0
        %v973 = vpack.c.bf16 %v972, %v971
        %s974 = scalar_lea.vmem %s1, 144
        %v975 = vld [vmem:[%s974] sm:$0xf]
        %v976 = vld [vmem:[%s974 + $0x4] sm:$0xf]
        %v977 = vld [vmem:[%s974 + $0x8] sm:$0xf]
        %v978 = vld [vmem:[%s974 + $0xc] sm:$0xf]
        %v979 = vld [vmem:[%s974 + $0x10] sm:$0xf]
        %v980 = vld [vmem:[%s974 + $0x14] sm:$0xf]
        %v987 = vunpack.c.l.b16 %v975
        %v988 = vunpack.c.l.b16 %v976
        %v989 = vunpack.c.l.b16 %v977
        %v990 = vunpack.c.l.b16 %v978
        %v991 = vunpack.c.l.b16 %v979
        %v992 = vunpack.c.l.b16 %v980
        %v993 = vpack.c.b16 %v988, %v987
        %v994 = vpack.c.b16 %v990, %v989
        %v995 = vpack.c.b16 %v992, %v991
        %v997 = vsel %vm260, %v993, 0
        %v1000 = vsel %vm260, %v994, 0
        %v1003 = vsel %vm260, %v995, 0
        %1005 = vmatprep.subr.bf16.mxu0 0
        %1006 = vmatpush1.bf16.msra.mxu0 %v973
        %1007 = vmatprep.subr.bf16.mxu0 0
        %1008 = vmatpush1.bf16.msra.mxu0 0
        %1009 = vmatprep.subr.bf16.mxu0 0
        %1010 = vmatpush1.bf16.msra.mxu0 0
        %1011 = vmatprep.subr.bf16.mxu0 0
        %1012 = vmatpush1.bf16.msra.mxu0 0
        %1013 = vmatprep.subr.bf16.mxu0 0
        %1014 = vmatpush1.bf16.msra.mxu0 0
        %1015 = vmatprep.subr.bf16.mxu0 0
        %1016 = vmatpush1.bf16.msra.mxu0 0
        %1017 = vmatprep.subr.bf16.mxu0 0
        %1018 = vmatpush1.bf16.msra.mxu0 0
        %1019 = vmatprep.subr.bf16.mxu0 0
        %1020 = vmatpush1.bf16.msra.mxu0 0
        %1021 = vmatprep.subr.bf16.mxu0 0
        %1022 = vmatpush1.bf16.msra.mxu0 0
        %1023 = vmatprep.subr.bf16.mxu0 0
        %1024 = vmatpush1.bf16.msra.mxu0 0
        %1025 = vmatprep.subr.bf16.mxu0 0
        %1026 = vmatpush1.bf16.msra.mxu0 0
        %1027 = vmatprep.subr.bf16.mxu0 0
        %1028 = vmatpush1.bf16.msra.mxu0 0
        %1029 = vmatprep.subr.bf16.mxu0 0
        %1030 = vmatpush1.bf16.msra.mxu0 0
        %1031 = vmatprep.subr.bf16.mxu0 0
        %1032 = vmatpush1.bf16.msra.mxu0 0
        %1033 = vmatprep.subr.bf16.mxu0 0
        %1034 = vmatpush1.bf16.msra.mxu0 0
        %1035 = vmatprep.subr.bf16.mxu0 0
        %1036 = vmatpush1.bf16.msra.mxu0 0
        %1037 = vmatprep.mubr.bf16.mxu0 0
        %1038 = vmatmul.mubr.bf16.gmra.mrb[0].mxu0 %v997
        %v1039 = vpop.f32.mrb[0].mxu0
        %v1040 = vadd.f32 0.0, %v1039
        %v1041 = vpop.f32.mrb[0].mxu0
        %v1042 = vpop.f32.mrb[0].mxu0
        %v1043 = vadd.f32 0.0, %v1042
        %v1044 = vpop.f32.mrb[0].mxu0
        %1045 = vmatprep.mubr.bf16.mxu0 0
        %1046 = vmatmul.mubr.bf16.gmra.mrb[0].mxu0 %v1000
        %v1047 = vpop.f32.mrb[0].mxu0
        %v1048 = vadd.f32 0.0, %v1047
        %v1049 = vpop.f32.mrb[0].mxu0
        %v1050 = vpop.f32.mrb[0].mxu0
        %v1051 = vadd.f32 0.0, %v1050
        %v1052 = vpop.f32.mrb[0].mxu0
        %1053 = vmatprep.mubr.bf16.mxu0 0
        %1054 = vmatmul.mubr.bf16.gmra.mrb[0].mxu0 %v1003
        %v1055 = vpop.f32.mrb[0].mxu0
        %v1056 = vadd.f32 0.0, %v1055
        %v1057 = vpop.f32.mrb[0].mxu0
        %v1058 = vpop.f32.mrb[0].mxu0
        %v1059 = vadd.f32 0.0, %v1058
        %v1060 = vpop.f32.mrb[0].mxu0
        %1061 = vdwg.mxu0
        %1062 = vrot.lane.b32.xlu0 %v1040, 1
        %v1063 = vpop.permute.xlu0 %1062
        %1064 = vrot.lane.b32.xlu0 %v1043, 1
        %v1065 = vpop.permute.xlu0 %1064
        %v1066 = vsel %vm229, 0.0, %v1063
        %v1067 = vsel %vm229, 0.0, %v1065
        %1068 = vrot.lane.b32.xlu0 %v1056, 127
        %v1069 = vpop.permute.xlu0 %1068
        %1070 = vrot.lane.b32.xlu0 %v1059, 127
        %v1071 = vpop.permute.xlu0 %1070
        %v1072 = vsel %vm230, 0.0, %v1069
        %v1073 = vsel %vm230, 0.0, %v1071
        %v1074 = vadd.f32 %v1066, %v1048
        %v1075 = vadd.f32 %v1067, %v1051
        %v1076 = vadd.f32 %v1074, %v1072
        %v1077 = vadd.f32 %v1075, %v1073
        %s1078 = scalar_lea.vmem %s2, 96
        %v1079 = vld [vmem:[%s1078] sm:$0xff]
        %v1080 = vld [vmem:[%s1078 + $0x8] sm:$0xff]
        %1082 = vset.pattern.permute.xlu0 0
        %1083 = vperm.xlu0 %1082, %v1079
        %v1084 = vpop.permute.xlu0 %1083
        %1087 = vset.pattern.permute.xlu0 0
        %1088 = vperm.xlu0 %1087, %v1080
        %v1089 = vpop.permute.xlu0 %1088
        %v1091 = vadd.f32 %v1076, %v1084
        %v1092 = vadd.f32 %v1077, %v1089
        %v1093 = vadd.f32 %v1091, %v849
        %v1094 = vadd.f32 %v1092, %v850
        %v1095 = vmax.f32 %v1093, 0.0
        %v1096 = vmax.f32 %v1094, 0.0
        %v1097 = vpack.c.bf16 %v1096, %v1095
        %s1098 = scalar_lea.vmem %s1, 168
        %v1099 = vld [vmem:[%s1098] sm:$0xf]
        %v1100 = vld [vmem:[%s1098 + $0x4] sm:$0xf]
        %v1101 = vld [vmem:[%s1098 + $0x8] sm:$0xf]
        %v1102 = vld [vmem:[%s1098 + $0xc] sm:$0xf]
        %v1103 = vld [vmem:[%s1098 + $0x10] sm:$0xf]
        %v1104 = vld [vmem:[%s1098 + $0x14] sm:$0xf]
        %v1111 = vunpack.c.l.b16 %v1099
        %v1112 = vunpack.c.l.b16 %v1100
        %v1113 = vunpack.c.l.b16 %v1101
        %v1114 = vunpack.c.l.b16 %v1102
        %v1115 = vunpack.c.l.b16 %v1103
        %v1116 = vunpack.c.l.b16 %v1104
        %v1117 = vpack.c.b16 %v1112, %v1111
        %v1118 = vpack.c.b16 %v1114, %v1113
        %v1119 = vpack.c.b16 %v1116, %v1115
        %v1121 = vsel %vm260, %v1117, 0
        %v1124 = vsel %vm260, %v1118, 0
        %v1127 = vsel %vm260, %v1119, 0
        %1129 = vmatprep.subr.bf16.mxu0 0
        %1130 = vmatpush1.bf16.msra.mxu0 %v1097
        %1131 = vmatprep.subr.bf16.mxu0 0
        %1132 = vmatpush1.bf16.msra.mxu0 0
        %1133 = vmatprep.subr.bf16.mxu0 0
        %1134 = vmatpush1.bf16.msra.mxu0 0
        %1135 = vmatprep.subr.bf16.mxu0 0
        %1136 = vmatpush1.bf16.msra.mxu0 0
        %1137 = vmatprep.subr.bf16.mxu0 0
        %1138 = vmatpush1.bf16.msra.mxu0 0
        %1139 = vmatprep.subr.bf16.mxu0 0
        %1140 = vmatpush1.bf16.msra.mxu0 0
        %1141 = vmatprep.subr.bf16.mxu0 0
        %1142 = vmatpush1.bf16.msra.mxu0 0
        %1143 = vmatprep.subr.bf16.mxu0 0
        %1144 = vmatpush1.bf16.msra.mxu0 0
        %1145 = vmatprep.subr.bf16.mxu0 0
        %1146 = vmatpush1.bf16.msra.mxu0 0
        %1147 = vmatprep.subr.bf16.mxu0 0
        %1148 = vmatpush1.bf16.msra.mxu0 0
        %1149 = vmatprep.subr.bf16.mxu0 0
        %1150 = vmatpush1.bf16.msra.mxu0 0
        %1151 = vmatprep.subr.bf16.mxu0 0
        %1152 = vmatpush1.bf16.msra.mxu0 0
        %1153 = vmatprep.subr.bf16.mxu0 0
        %1154 = vmatpush1.bf16.msra.mxu0 0
        %1155 = vmatprep.subr.bf16.mxu0 0
        %1156 = vmatpush1.bf16.msra.mxu0 0
        %1157 = vmatprep.subr.bf16.mxu0 0
        %1158 = vmatpush1.bf16.msra.mxu0 0
        %1159 = vmatprep.subr.bf16.mxu0 0
        %1160 = vmatpush1.bf16.msra.mxu0 0
        %1161 = vmatprep.mubr.bf16.mxu0 0
        %1162 = vmatmul.mubr.bf16.gmra.mrb[0].mxu0 %v1121
        %v1163 = vpop.f32.mrb[0].mxu0
        %v1164 = vadd.f32 0.0, %v1163
        %v1165 = vpop.f32.mrb[0].mxu0
        %v1166 = vpop.f32.mrb[0].mxu0
        %v1167 = vadd.f32 0.0, %v1166
        %v1168 = vpop.f32.mrb[0].mxu0
        %1169 = vmatprep.mubr.bf16.mxu0 0
        %1170 = vmatmul.mubr.bf16.gmra.mrb[0].mxu0 %v1124
        %v1171 = vpop.f32.mrb[0].mxu0
        %v1172 = vadd.f32 0.0, %v1171
        %v1173 = vpop.f32.mrb[0].mxu0
        %v1174 = vpop.f32.mrb[0].mxu0
        %v1175 = vadd.f32 0.0, %v1174
        %v1176 = vpop.f32.mrb[0].mxu0
        %1177 = vmatprep.mubr.bf16.mxu0 0
        %1178 = vmatmul.mubr.bf16.gmra.mrb[0].mxu0 %v1127
        %v1179 = vpop.f32.mrb[0].mxu0
        %v1180 = vadd.f32 0.0, %v1179
        %v1181 = vpop.f32.mrb[0].mxu0
        %v1182 = vpop.f32.mrb[0].mxu0
        %v1183 = vadd.f32 0.0, %v1182
        %v1184 = vpop.f32.mrb[0].mxu0
        %1185 = vdwg.mxu0
        %1186 = vrot.lane.b32.xlu0 %v1164, 1
        %v1187 = vpop.permute.xlu0 %1186
        %1188 = vrot.lane.b32.xlu0 %v1167, 1
        %v1189 = vpop.permute.xlu0 %1188
        %v1190 = vsel %vm229, 0.0, %v1187
        %v1191 = vsel %vm229, 0.0, %v1189
        %1192 = vrot.lane.b32.xlu0 %v1180, 127
        %v1193 = vpop.permute.xlu0 %1192
        %1194 = vrot.lane.b32.xlu0 %v1183, 127
        %v1195 = vpop.permute.xlu0 %1194
        %v1196 = vsel %vm230, 0.0, %v1193
        %v1197 = vsel %vm230, 0.0, %v1195
        %v1198 = vadd.f32 %v1190, %v1172
        %v1199 = vadd.f32 %v1191, %v1175
        %v1200 = vadd.f32 %v1198, %v1196
        %v1201 = vadd.f32 %v1199, %v1197
        %s1202 = scalar_lea.vmem %s2, 112
        %v1203 = vld [vmem:[%s1202] sm:$0xff]
        %v1204 = vld [vmem:[%s1202 + $0x8] sm:$0xff]
        %1206 = vset.pattern.permute.xlu0 0
        %1207 = vperm.xlu0 %1206, %v1203
        %v1208 = vpop.permute.xlu0 %1207
        %1211 = vset.pattern.permute.xlu0 0
        %1212 = vperm.xlu0 %1211, %v1204
        %v1213 = vpop.permute.xlu0 %1212
        %v1215 = vadd.f32 %v1200, %v1208
        %v1216 = vadd.f32 %v1201, %v1213
        %v1217 = vmax.f32 %v1215, 0.0
        %v1218 = vmax.f32 %v1216, 0.0
        %1219 = vst [vmem:[%s213] sm:$0xff] %v1217
        %1220 = vst [vmem:[%s213 + $0x8] sm:$0xff] %v1218
        %s1221 = sand.u32 %s93, 1
        %s1222 = scalar_lea.sflag [#allocation4], %s1221
        %s1223 = sand.u32 %s93, 1
        %s1224 = smul.addr %s1223, 16
        %s1225 = scalar_lea.vmem [#allocation3], %s1224
        // Predicated region
        $region74: #{tpu_custom_call.1} parent=68 // pred_check
          %p1226 = pneg %p103
        $region75: #{tpu_custom_call.1} parent=68 // pred_check_branch
          %1228 = sbr.rel (%p1226) target = $region77
        $region76: #{tpu_custom_call.1} parent=68 // pred_region
          %s1230 = ssub.s32 256, 256
          %1231 = vsyncadd %s1222, %s1230
          %s1232 = smul.addr %s17, 128
          %s1233 = scalar_lea.hbm %s3, %s1232
          %s1234 = sshll.u32 %s1225, 4
          %s1235 = int_to_ptr.vmem [resolvable:$true] %s1234
          %1240 = dma.vmem_to_hbm [thread:$0]  %s1235, 256, %s1233, %s1222, 128, 256, 8
        $region77: #{tpu_custom_call.1} parent=68 // pred_fallthru
          _
      $region69: #{tpu_custom_call.1} parent=5 // pred_fallthru
        _
      %p1241 = scmp.le.s32.totalorder 2, %s12
      // Predicated region
      $region78: #{tpu_custom_call.1} parent=5 // pred_check
        %p1242 = pneg %p1241
      $region79: #{tpu_custom_call.1} parent=5 // pred_check_branch
        %1244 = sbr.rel (%p1242) target = $region81
      $region80: #{tpu_custom_call.1} parent=5 // pred_region
        %s1245 = ssub.s32 %s12, 2
        // Predicated region
        $region82: #{tpu_custom_call.1} parent=80 // pred_check
          %p1246 = pneg %p109
        $region83: #{tpu_custom_call.1} parent=80 // pred_check_branch
          %1248 = sbr.rel (%p1246) target = $region85
        $region84: #{tpu_custom_call.1} parent=80 // pred_region
          %s1249 = sand.u32 %s94, 1
          %s1250 = scalar_lea.sflag [#allocation4], %s1249
          %s1251 = sand.u32 %s94, 1
          %s1252 = smul.addr %s1251, 16
          %s1253 = scalar_lea.vmem [#allocation3], %s1252
          %1254 = dma.done %s1250, 256
        $region85: #{tpu_custom_call.1} parent=80 // pred_fallthru
          _
      $region81: #{tpu_custom_call.1} parent=5 // pred_fallthru
        _
    $region6: #{tpu_custom_call.1} parent=1 // loop_footer
      %s16 = sadd.s32 1, %s12
    $region7: #{tpu_custom_call.1} parent=1 // loop_footer_branch
      %11 = sbr.rel target = $region3
    $region8: #{tpu_custom_call.1} parent=1 // loop_exit
      _
    %1255 = vsyncpa [#allocation4], 1
    %s1256 = scalar_lea.sflag [#allocation4], 1
    %1257 = vsyncpa %s1256, 1

</llo_original>
